<compile_context>
chip_gen: v7x
topology: tpu7x:2x2x1
jax: 0.10.0
libtpu: 0.0.40
codegen_flags: <defaults>
</compile_context>

<pallas_src>
import functools

import numpy as np
import jax
import jax.numpy as jnp
from jax.experimental import pallas as pl
from jax.experimental.pallas import tpu as pltpu


# ----------------------------------------------------------------------------
# Host-side helpers
# ----------------------------------------------------------------------------
def _interp_matrix(out_size, in_size):
    """R such that (R @ signal) == F.interpolate(..., align_corners=False)."""
    scale = in_size / out_size
    d = np.arange(out_size)
    s = np.maximum(scale * (d + 0.5) - 0.5, 0.0)
    i0 = np.minimum(np.floor(s).astype(np.int64), in_size - 1)
    i1 = np.minimum(i0 + 1, in_size - 1)
    w1 = s - i0
    w0 = 1.0 - w1
    r = np.zeros((out_size, in_size), dtype=np.float32)
    r[d, i0] += w0
    r[d, i1] += w1
    return r


def _kron_interp_matrix(out_h, out_w, in_h, in_w):
    """K (in_h*in_w, out_h*out_w) s.t. x_flat @ K == bilinear_resize(x)_flat."""
    rh = _interp_matrix(out_h, in_h)           # (H, Hi)
    rw = _interp_matrix(out_w, in_w)           # (W, Wi)
    return np.kron(rh, rw).T.astype(np.float32)  # (Hi*Wi, H*W)


# ----------------------------------------------------------------------------
# Pallas kernel: one block of `bb` batch elements per grid step
# ----------------------------------------------------------------------------
def _ftm_kernel(e1_ref, e2_ref, e3_ref, e4_ref,
                k1_ref, k2_ref, k3_ref, k4_ref,
                w1_ref, w2_ref, o_ref, *, bb, C, HW):
    dot = functools.partial(jnp.dot, preferred_element_type=jnp.float32)

    # Multi-scale bilinear upsample + sum across scales: one lane-dense 2D
    # matmul per scale on the MXU.  acc: (bb*3C, HW), bands are contiguous
    # C-row blocks per batch element.
    acc = dot(e1_ref[...], k1_ref[...])
    acc = acc + dot(e2_ref[...], k2_ref[...])
    acc = acc + dot(e3_ref[...], k3_ref[...])
    acc = acc + dot(e4_ref[...], k4_ref[...])

    inv_hw = 1.0 / float(HW)
    for k in range(bb):                              # static, tiny loop over batch
        base = k * 3 * C
        lh = acc[base:base + C]                      # (C, HW)
        hl = acc[base + C:base + 2 * C]
        hh = acc[base + 2 * C:base + 3 * C]

        # --- SEAttention --------------------------------------------------
        x_sum = lh + hl + hh                         # (C, HW)
        pooled = jnp.sum(x_sum, axis=1, keepdims=True) * inv_hw   # (C, 1)
        hidden = jnp.maximum(dot(w1_ref[...], pooled), 0.0)       # (C//8, 1)
        logits = dot(w2_ref[...], hidden)                          # (3C, 1)
        gate = jax.nn.sigmoid(logits)                              # (3C, 1)

        out = (lh * gate[:C]
               + hl * gate[C:2 * C]
               + hh * gate[2 * C:3 * C])                           # (C, HW)
        o_ref[k * C:(k + 1) * C, :] = out.astype(o_ref.dtype)


# ----------------------------------------------------------------------------
# Wrapper
# ----------------------------------------------------------------------------
def ftm_forward(e1, e2, e3, e4, w_fc1, w_fc2, *, batch_block=1):
    """e_i: (B, C, 3, H_i, W_i) f32.  w_fc1: (C//8, C).  w_fc2: (3C, C//8).

    batch_block: batch elements per grid step.  1 -> B parallel steps
    (keeps both v7x TensorCores busy); B -> single fat step (minimal grid
    overhead on single-TC v5e/v6e).
    """
    es = (e1, e2, e3, e4)
    B, C, _, H, W = (int(s) for s in e1.shape)
    HW = H * W
    bb = batch_block
    assert B % bb == 0, "batch_block must divide B"

    # Host-precomputed Kronecker interpolation matrices (exact PyTorch
    # align_corners=False semantics, including edge clamping).
    ks = []
    for e in es:
        hi, wi = int(e.shape[3]), int(e.shape[4])
        ks.append(jnp.asarray(_kron_interp_matrix(H, W, hi, wi)))   # (hi*wi, HW)

    # Wrapper-side layout plumbing: (B, C, 3, Hi, Wi) -> (B*3*C, Hi*Wi) so
    # that each band is a contiguous C-row block (C is a multiple of 8).
    e_flat, e_specs = [], []
    for e in es:
        hi, wi = int(e.shape[3]), int(e.shape[4])
        ef = jnp.transpose(e, (0, 2, 1, 3, 4)).reshape(B * 3 * C, hi * wi)
        e_flat.append(ef)
        e_specs.append(pl.BlockSpec((bb * 3 * C, hi * wi), lambda i: (i, 0)))

    def full2d(arr):
        return pl.BlockSpec(tuple(int(s) for s in arr.shape), lambda i: (0, 0))

    kernel = functools.partial(_ftm_kernel, bb=bb, C=C, HW=HW)

    out_flat = pl.pallas_call(
        kernel,
        out_shape=jax.ShapeDtypeStruct((B * C, HW), jnp.float32),
        grid_spec=pltpu.PrefetchScalarGridSpec(
            num_scalar_prefetch=0,
            grid=(B // bb,),
            in_specs=(e_specs
                      + [full2d(m) for m in ks]
                      + [full2d(w_fc1), full2d(w_fc2)]),
            out_specs=pl.BlockSpec((bb * C, HW), lambda i: (i, 0)),
        ),
        compiler_params=pltpu.CompilerParams(
            dimension_semantics=("parallel",)),
    )(*e_flat, *ks, w_fc1, w_fc2)

    # Free reshape back to NCHW outside the kernel.
    return out_flat.reshape(B, C, H, W)


# ----------------------------------------------------------------------------
# Plain-JAX reference (independent gather-based bilinear) for validation
# ----------------------------------------------------------------------------
def _bilinear_resize_ref(x, out_h, out_w):
    """F.interpolate(x, size, mode='bilinear', align_corners=False) in JAX."""
    in_h, in_w = x.shape[-2], x.shape[-1]

    def coords(out_size, in_size):
        scale = in_size / out_size
        d = jnp.arange(out_size, dtype=jnp.float32)
        s = jnp.maximum(scale * (d + 0.5) - 0.5, 0.0)
        i0 = jnp.minimum(jnp.floor(s).astype(jnp.int32), in_size - 1)
        i1 = jnp.minimum(i0 + 1, in_size - 1)
        w1 = s - i0.astype(jnp.float32)
        return i0, i1, 1.0 - w1, w1

    h0, h1, wh0, wh1 = coords(out_h, in_h)
    v0, v1, wv0, wv1 = coords(out_w, in_w)
    xh = x[..., h0, :] * wh0[:, None] + x[..., h1, :] * wh1[:, None]
    return xh[..., v0] * wv0 + xh[..., v1] * wv1


def ftm_reference(e1, e2, e3, e4, w_fc1, w_fc2):
    es = (e1, e2, e3, e4)
    B, C, _, H, W = e1.shape

    def band_sum(idx):
        maps = [_bilinear_resize_ref(e[:, :, idx], H, W) for e in es]
        return functools.reduce(lambda a, b: a + b, maps)

    lh, hl, hh = band_sum(0), band_sum(1), band_sum(2)
    x = lh + hl + hh
    pooled = jnp.mean(x, axis=(2, 3))                          # (B, C)
    hidden = jnp.maximum(pooled @ w_fc1.T, 0.0)                # (B, C//8)
    gate = jax.nn.sigmoid(hidden @ w_fc2.T)[:, :, None, None]  # (B, 3C, 1, 1)
    return lh * gate[:, :C] + hl * gate[:, C:2 * C] + hh * gate[:, 2 * C:]


if __name__ == "__main__":
    key = jax.random.PRNGKey(0)
    B, C = 2, 16
    Cr = C // 8                                  # SEAttention reduction = 8
    sizes = [(16, 16), (8, 8), (4, 4), (2, 2)]   # e1 is the finest scale

    keys = jax.random.split(key, 6)
    e1, e2, e3, e4 = [
        jax.random.normal(k, (B, C, 3, h, w), dtype=jnp.float32)
        for k, (h, w) in zip(keys[:4], sizes)
    ]
    w_fc1 = 0.1 * jax.random.normal(keys[4], (Cr, C), dtype=jnp.float32)
    w_fc2 = 0.1 * jax.random.normal(keys[5], (3 * C, Cr), dtype=jnp.float32)

    # TODO(synk): FTM.__init__'s self.conv / self.att / self.sp are unused by
    # forward() and therefore intentionally not implemented.
    out = ftm_forward(e1, e2, e3, e4, w_fc1, w_fc2, batch_block=1)
    out = jax.block_until_ready(out)

    ref = ftm_reference(e1, e2, e3, e4, w_fc1, w_fc2)
    assert out.shape == (B, C, 16, 16)
    err = float(jnp.max(jnp.abs(out - ref)))
    assert jnp.allclose(out, ref, atol=1e-4, rtol=1e-4), (
        f"mismatch vs reference: max abs err = {err}")

    print("KERNEL_OK")
</pallas_src>

<mosaic_0001>
module attributes {stable_mosaic.version = 11 : i64} {
  func.func @_ftm_kernel(%arg0: i32, %arg1: memref<48x256xf32, #tpu.memory_space<vmem>>, %arg2: memref<48x64xf32, #tpu.memory_space<vmem>>, %arg3: memref<48x16xf32, #tpu.memory_space<vmem>>, %arg4: memref<48x4xf32, #tpu.memory_space<vmem>>, %arg5: memref<256x256xf32, #tpu.memory_space<vmem>>, %arg6: memref<64x256xf32, #tpu.memory_space<vmem>>, %arg7: memref<16x256xf32, #tpu.memory_space<vmem>>, %arg8: memref<4x256xf32, #tpu.memory_space<vmem>>, %arg9: memref<2x16xf32, #tpu.memory_space<vmem>>, %arg10: memref<48x2xf32, #tpu.memory_space<vmem>>, %arg11: memref<16x256xf32, #tpu.memory_space<vmem>>) attributes {dimension_semantics = [#tpu.dimension_semantics<parallel>], iteration_bounds = array<i64: 2>, scalar_prefetch = 0 : i64, scratch_operands = 0 : i64, tpu.core_type = #tpu.core_type<tc>, window_params = [{transform_indices = @transform_0, window_bounds = array<i64: 48, 256>}, {transform_indices = @transform_1, window_bounds = array<i64: 48, 64>}, {transform_indices = @transform_2, window_bounds = array<i64: 48, 16>}, {transform_indices = @transform_3, window_bounds = array<i64: 48, 4>}, {pipeline_mode = #tpu.pipeline_mode<synchronous>, transform_indices = @transform_4, window_bounds = array<i64: 256, 256>}, {pipeline_mode = #tpu.pipeline_mode<synchronous>, transform_indices = @transform_5, window_bounds = array<i64: 64, 256>}, {pipeline_mode = #tpu.pipeline_mode<synchronous>, transform_indices = @transform_6, window_bounds = array<i64: 16, 256>}, {pipeline_mode = #tpu.pipeline_mode<synchronous>, transform_indices = @transform_7, window_bounds = array<i64: 4, 256>}, {pipeline_mode = #tpu.pipeline_mode<synchronous>, transform_indices = @transform_8, window_bounds = array<i64: 2, 16>}, {pipeline_mode = #tpu.pipeline_mode<synchronous>, transform_indices = @transform_9, window_bounds = array<i64: 48, 2>}, {transform_indices = @transform_10, window_bounds = array<i64: 16, 256>}]} {
    %c0 = arith.constant 0 : index
    %c0_0 = arith.constant 0 : index
    %0 = vector.load %arg1[%c0, %c0_0] : memref<48x256xf32, #tpu.memory_space<vmem>>, vector<48x256xf32>
    %c0_1 = arith.constant 0 : index
    %c0_2 = arith.constant 0 : index
    %1 = vector.load %arg5[%c0_1, %c0_2] : memref<256x256xf32, #tpu.memory_space<vmem>>, vector<256x256xf32>
    %cst = arith.constant dense<0.000000e+00> : vector<48x256xf32>
    %2 = tpu.matmul %0, %1, %cst {dimension_numbers = #tpu.dot_dimension_numbers<[1], [0], [0], [1], [0, 0, 1, 1], [], []>} : vector<48x256xf32>, vector<256x256xf32>, vector<48x256xf32> -> vector<48x256xf32>
    %c0_3 = arith.constant 0 : index
    %c0_4 = arith.constant 0 : index
    %3 = vector.load %arg2[%c0_3, %c0_4] : memref<48x64xf32, #tpu.memory_space<vmem>>, vector<48x64xf32>
    %c0_5 = arith.constant 0 : index
    %c0_6 = arith.constant 0 : index
    %4 = vector.load %arg6[%c0_5, %c0_6] : memref<64x256xf32, #tpu.memory_space<vmem>>, vector<64x256xf32>
    %cst_7 = arith.constant dense<0.000000e+00> : vector<48x256xf32>
    %5 = tpu.matmul %3, %4, %cst_7 {dimension_numbers = #tpu.dot_dimension_numbers<[1], [0], [0], [1], [0, 0, 1, 1], [], []>} : vector<48x64xf32>, vector<64x256xf32>, vector<48x256xf32> -> vector<48x256xf32>
    %6 = arith.addf %2, %5 : vector<48x256xf32>
    %c0_8 = arith.constant 0 : index
    %c0_9 = arith.constant 0 : index
    %7 = vector.load %arg3[%c0_8, %c0_9] : memref<48x16xf32, #tpu.memory_space<vmem>>, vector<48x16xf32>
    %c0_10 = arith.constant 0 : index
    %c0_11 = arith.constant 0 : index
    %8 = vector.load %arg7[%c0_10, %c0_11] : memref<16x256xf32, #tpu.memory_space<vmem>>, vector<16x256xf32>
    %cst_12 = arith.constant dense<0.000000e+00> : vector<48x256xf32>
    %9 = tpu.matmul %7, %8, %cst_12 {dimension_numbers = #tpu.dot_dimension_numbers<[1], [0], [0], [1], [0, 0, 1, 1], [], []>} : vector<48x16xf32>, vector<16x256xf32>, vector<48x256xf32> -> vector<48x256xf32>
    %10 = arith.addf %6, %9 : vector<48x256xf32>
    %c0_13 = arith.constant 0 : index
    %c0_14 = arith.constant 0 : index
    %11 = vector.load %arg4[%c0_13, %c0_14] : memref<48x4xf32, #tpu.memory_space<vmem>>, vector<48x4xf32>
    %c0_15 = arith.constant 0 : index
    %c0_16 = arith.constant 0 : index
    %12 = vector.load %arg8[%c0_15, %c0_16] : memref<4x256xf32, #tpu.memory_space<vmem>>, vector<4x256xf32>
    %cst_17 = arith.constant dense<0.000000e+00> : vector<48x256xf32>
    %13 = tpu.matmul %11, %12, %cst_17 {dimension_numbers = #tpu.dot_dimension_numbers<[1], [0], [0], [1], [0, 0, 1, 1], [], []>} : vector<48x4xf32>, vector<4x256xf32>, vector<48x256xf32> -> vector<48x256xf32>
    %14 = arith.addf %10, %13 : vector<48x256xf32>
    %15 = vector.extract_strided_slice %14 {offsets = [0, 0], sizes = [16, 256], strides = [1, 1]} : vector<48x256xf32> to vector<16x256xf32>
    %16 = vector.extract_strided_slice %14 {offsets = [16, 0], sizes = [16, 256], strides = [1, 1]} : vector<48x256xf32> to vector<16x256xf32>
    %17 = vector.extract_strided_slice %14 {offsets = [32, 0], sizes = [16, 256], strides = [1, 1]} : vector<48x256xf32> to vector<16x256xf32>
    %18 = arith.addf %15, %16 : vector<16x256xf32>
    %19 = arith.addf %18, %17 : vector<16x256xf32>
    %cst_18 = arith.constant dense<0.000000e+00> : vector<16xf32>
    %20 = vector.multi_reduction <add>, %19, %cst_18 [1] : vector<16x256xf32> to vector<16xf32>
    %21 = vector.shape_cast %20 : vector<16xf32> to vector<16x1xf32>
    %cst_19 = arith.constant 3.906250e-03 : f32
    %22 = vector.broadcast %cst_19 : f32 to vector<16x1xf32>
    %23 = arith.mulf %21, %22 : vector<16x1xf32>
    %c0_20 = arith.constant 0 : index
    %c0_21 = arith.constant 0 : index
    %24 = vector.load %arg9[%c0_20, %c0_21] : memref<2x16xf32, #tpu.memory_space<vmem>>, vector<2x16xf32>
    %cst_22 = arith.constant dense<0.000000e+00> : vector<2x1xf32>
    %25 = tpu.matmul %24, %23, %cst_22 {dimension_numbers = #tpu.dot_dimension_numbers<[1], [0], [0], [1], [0, 0, 1, 1], [], []>} : vector<2x16xf32>, vector<16x1xf32>, vector<2x1xf32> -> vector<2x1xf32>
    %cst_23 = arith.constant 0.000000e+00 : f32
    %26 = vector.broadcast %cst_23 : f32 to vector<2x1xf32>
    %27 = arith.maximumf %25, %26 : vector<2x1xf32>
    %c0_24 = arith.constant 0 : index
    %c0_25 = arith.constant 0 : index
    %28 = vector.load %arg10[%c0_24, %c0_25] : memref<48x2xf32, #tpu.memory_space<vmem>>, vector<48x2xf32>
    %cst_26 = arith.constant dense<0.000000e+00> : vector<48x1xf32>
    %29 = tpu.matmul %28, %27, %cst_26 {dimension_numbers = #tpu.dot_dimension_numbers<[1], [0], [0], [1], [0, 0, 1, 1], [], []>} : vector<48x2xf32>, vector<2x1xf32>, vector<48x1xf32> -> vector<48x1xf32>
    %30 = arith.negf %29 : vector<48x1xf32>
    %31 = math.exp %30 : vector<48x1xf32>
    %cst_27 = arith.constant 1.000000e+00 : f32
    %32 = vector.broadcast %cst_27 : f32 to vector<48x1xf32>
    %33 = arith.addf %32, %31 : vector<48x1xf32>
    %34 = arith.divf %32, %33 : vector<48x1xf32>
    %35 = vector.extract_strided_slice %34 {offsets = [0, 0], sizes = [16, 1], strides = [1, 1]} : vector<48x1xf32> to vector<16x1xf32>
    %36 = vector.broadcast %35 : vector<16x1xf32> to vector<16x256xf32>
    %37 = arith.mulf %15, %36 : vector<16x256xf32>
    %38 = vector.extract_strided_slice %34 {offsets = [16, 0], sizes = [16, 1], strides = [1, 1]} : vector<48x1xf32> to vector<16x1xf32>
    %39 = vector.broadcast %38 : vector<16x1xf32> to vector<16x256xf32>
    %40 = arith.mulf %16, %39 : vector<16x256xf32>
    %41 = arith.addf %37, %40 : vector<16x256xf32>
    %42 = vector.extract_strided_slice %34 {offsets = [32, 0], sizes = [16, 1], strides = [1, 1]} : vector<48x1xf32> to vector<16x1xf32>
    %43 = vector.broadcast %42 : vector<16x1xf32> to vector<16x256xf32>
    %44 = arith.mulf %17, %43 : vector<16x256xf32>
    %45 = arith.addf %41, %44 : vector<16x256xf32>
    %c0_28 = arith.constant 0 : index
    %c0_29 = arith.constant 0 : index
    %46 = vector.load %arg11[%c0_28, %c0_29] : memref<16x256xf32, #tpu.memory_space<vmem>>, vector<16x256xf32>
    tpu.vector_store %arg11[%c0_28, %c0_29], %45 {strides = array<i32>} : memref<16x256xf32, #tpu.memory_space<vmem>>, vector<16x256xf32>,
    return
  }
  func.func @transform_0(%arg0: i32) -> (i32, i32) {
    %c0_i32 = arith.constant 0 : i32
    %c0_i32_0 = arith.constant 0 : i32
    return %arg0, %c0_i32 : i32, i32
  }
  func.func @transform_1(%arg0: i32) -> (i32, i32) {
    %c0_i32 = arith.constant 0 : i32
    %c0_i32_0 = arith.constant 0 : i32
    return %arg0, %c0_i32 : i32, i32
  }
  func.func @transform_2(%arg0: i32) -> (i32, i32) {
    %c0_i32 = arith.constant 0 : i32
    %c0_i32_0 = arith.constant 0 : i32
    return %arg0, %c0_i32 : i32, i32
  }
  func.func @transform_3(%arg0: i32) -> (i32, i32) {
    %c0_i32 = arith.constant 0 : i32
    %c0_i32_0 = arith.constant 0 : i32
    return %arg0, %c0_i32 : i32, i32
  }
  func.func @transform_4(%arg0: i32) -> (i32, i32) {
    %c0_i32 = arith.constant 0 : i32
    %c0_i32_0 = arith.constant 0 : i32
    %c0_i32_1 = arith.constant 0 : i32
    return %c0_i32, %c0_i32_0 : i32, i32
  }
  func.func @transform_5(%arg0: i32) -> (i32, i32) {
    %c0_i32 = arith.constant 0 : i32
    %c0_i32_0 = arith.constant 0 : i32
    %c0_i32_1 = arith.constant 0 : i32
    return %c0_i32, %c0_i32_0 : i32, i32
  }
  func.func @transform_6(%arg0: i32) -> (i32, i32) {
    %c0_i32 = arith.constant 0 : i32
    %c0_i32_0 = arith.constant 0 : i32
    %c0_i32_1 = arith.constant 0 : i32
    return %c0_i32, %c0_i32_0 : i32, i32
  }
  func.func @transform_7(%arg0: i32) -> (i32, i32) {
    %c0_i32 = arith.constant 0 : i32
    %c0_i32_0 = arith.constant 0 : i32
    %c0_i32_1 = arith.constant 0 : i32
    return %c0_i32, %c0_i32_0 : i32, i32
  }
  func.func @transform_8(%arg0: i32) -> (i32, i32) {
    %c0_i32 = arith.constant 0 : i32
    %c0_i32_0 = arith.constant 0 : i32
    %c0_i32_1 = arith.constant 0 : i32
    return %c0_i32, %c0_i32_0 : i32, i32
  }
  func.func @transform_9(%arg0: i32) -> (i32, i32) {
    %c0_i32 = arith.constant 0 : i32
    %c0_i32_0 = arith.constant 0 : i32
    %c0_i32_1 = arith.constant 0 : i32
    return %c0_i32, %c0_i32_0 : i32, i32
  }
  func.func @transform_10(%arg0: i32) -> (i32, i32) {
    %c0_i32 = arith.constant 0 : i32
    %c0_i32_0 = arith.constant 0 : i32
    return %arg0, %c0_i32 : i32, i32
  }
}

</mosaic_0001>

<llo_original>
// kernel: tpu_custom_call.1
$region0: #{tpu_custom_call.1}
  #allocation0 [shape = 'u32[]', space=smem, size = 0x4, offset = 0x4, fixed_abs, tag = 'smem constant byte address 0x4 - core index']
  #allocation1 [shape = 'u32[144,128]{1,0:T(1,128)}', space=vmem, size = 0x12000, scoped, tag = 'internal scratch']
  %s0 = inlined_call_operand.vmem [shape: f32[96,256], index: 0, kind: input, shape index: {}]
  %s1 = inlined_call_operand.vmem [shape: f32[96,64], index: 1, kind: input, shape index: {}]
  %s2 = inlined_call_operand.vmem [shape: f32[96,16], index: 2, kind: input, shape index: {}]
  %s3 = inlined_call_operand.vmem [shape: f32[96,4], index: 3, kind: input, shape index: {}]
  %s4 = inlined_call_operand.hbm [shape: f32[256,256], index: 4, kind: input, shape index: {}]
  %s5 = inlined_call_operand.vmem [shape: f32[64,256], index: 5, kind: input, shape index: {}]
  %s6 = inlined_call_operand.vmem [shape: f32[16,256], index: 6, kind: input, shape index: {}]
  %s7 = inlined_call_operand.vmem [shape: f32[4,256], index: 7, kind: input, shape index: {}]
  %s8 = inlined_call_operand.vmem [shape: f32[2,16], index: 8, kind: input, shape index: {}]
  %s9 = inlined_call_operand.vmem [shape: f32[48,2], index: 9, kind: input, shape index: {}]
  %s10 = inlined_call_operand.hbm [shape: f32[32,256], index: 10, kind: output, shape index: {}]
  %s11 = sld [smem:[#allocation0]]
  $region77: #{tpu_custom_call.1} parent=0
    _
  %s13 = ssub.s32 1, %s11
  %s14 = scalar_select 0, %s13, %s11
  $region1: #{tpu_custom_call.1} parent=0
    #allocation2 [shape = 'u8[262144]{0}', space=vmem, size = 0x40000, scoped, tag = 'input window, operand 4, single buffered']
    #allocation3 [shape = 's32[2]{0}', space=sflag, size = 0x8, scoped, tag = 'scoped memory for tpu_custom_call.1']
    #allocation4 [shape = 's32[2]{0}', space=sflag, size = 0x8, scoped, tag = 'scoped memory for tpu_custom_call.1']
    #allocation5 [shape = 'u8[32768]{0}', space=vmem, size = 0x8000, scoped, tag = 'output window, operand 0']
    %15 = vsyncpa [#allocation3], 0
    %16 = vsyncpa [#allocation4], 0
    %s17 = scalar_lea.sflag [#allocation4], 1
    %18 = vsyncpa %s17, 0
    loop: start=0, step=1, limit=4
    $region2: #{tpu_custom_call.1} parent=1 // loop_pre_header
      _
    $region3: #{tpu_custom_call.1} parent=1 // loop_header
      %s20 = sphi 0, %s24
      %p21 = scmp.ge.s32.totalorder %s20, 4
      %s30 = sphi 0, %s32
      %s33 = sphi 0, %s30
      %s34 = sphi 0, %s33
      %s50 = sphi 0, %s34
      %s56 = sphi 0, %s58
      %s59 = sphi 0, %s56
      %s60 = sphi 0, %s59
      %s76 = sphi 0, %s60
      %s82 = sphi 0, %s84
      %s85 = sphi 0, %s82
      %s86 = sphi 0, %s85
      %s102 = sphi 0, %s86
      %s108 = sphi 0, %s110
      %s111 = sphi 0, %s108
      %s112 = sphi 0, %s111
      %s128 = sphi 0, %s112
      %s132 = sphi 0, %s132
      %s134 = sphi 0, %s132
      %s135 = sphi 0, %s134
      %s149 = sphi 0, %s135
      %s153 = sphi 0, %s153
      %s155 = sphi 0, %s153
      %s156 = sphi 0, %s155
      %s170 = sphi 0, %s156
      %s174 = sphi 0, %s174
      %s176 = sphi 0, %s174
      %s177 = sphi 0, %s176
      %s191 = sphi 0, %s177
      %s195 = sphi 0, %s195
      %s197 = sphi 0, %s195
      %s198 = sphi 0, %s197
      %s212 = sphi 0, %s198
      %s216 = sphi 0, %s216
      %s218 = sphi 0, %s216
      %s219 = sphi 0, %s218
      %s233 = sphi 0, %s219
      %s237 = sphi 0, %s237
      %s239 = sphi 0, %s237
      %s240 = sphi 0, %s239
      %s254 = sphi 0, %s240
      %s260 = sphi 0, %s262
      %s263 = sphi 0, %s260
      %s264 = sphi 0, %s263
      %s280 = sphi 0, %s264
    $region4: #{tpu_custom_call.1} parent=1 // loop_header_branch
      %23 = sbr.rel (%p21) target = $region8
    $region5: #{tpu_custom_call.1} parent=1 // loop_body
      %s25 = ssub.s32 %s20, 1
      %s26 = ssub.s32 %s20, 2
      %s27 = sadd.s32 %s20, 1
      %s28 = ssub.s32 %s20, %s27
      %p29 = scmp.eq.s32.totalorder %s28, 0
      %s31 = sadd.s32 %s30, 1
      %s32 = scalar_select %p29, %s30, %s31
      %p35 = pneg %p29
      %p36 = scmp.eq.s32.totalorder %s20, 1
      %p37 = por %p35, %p36
      %p38 = scmp.ne.s32.totalorder %s30, %s33
      %p39 = scmp.eq.s32.totalorder %s20, 0
      %p40 = por %p38, %p39
      %p41 = scmp.ne.s32.totalorder %s30, %s33
      %p42 = scmp.eq.s32.totalorder %s25, 1
      %p43 = por %p41, %p42
      %p44 = scmp.ne.s32.totalorder %s33, %s34
      %p45 = scmp.eq.s32.totalorder %s25, 0
      %p46 = por %p44, %p45
      %p47 = scmp.ne.s32.totalorder %s33, %s34
      %p48 = scmp.eq.s32.totalorder %s26, 1
      %p49 = por %p47, %p48
      %p51 = scmp.ne.s32.totalorder %s34, %s50
      %p52 = scmp.eq.s32.totalorder %s26, 0
      %p53 = por %p51, %p52
      %s54 = ssub.s32 %s20, %s27
      %p55 = scmp.eq.s32.totalorder %s54, 0
      %s57 = sadd.s32 %s56, 1
      %s58 = scalar_select %p55, %s56, %s57
      %p61 = pneg %p55
      %p62 = scmp.eq.s32.totalorder %s20, 1
      %p63 = por %p61, %p62
      %p64 = scmp.ne.s32.totalorder %s56, %s59
      %p65 = scmp.eq.s32.totalorder %s20, 0
      %p66 = por %p64, %p65
      %p67 = scmp.ne.s32.totalorder %s56, %s59
      %p68 = scmp.eq.s32.totalorder %s25, 1
      %p69 = por %p67, %p68
      %p70 = scmp.ne.s32.totalorder %s59, %s60
      %p71 = scmp.eq.s32.totalorder %s25, 0
      %p72 = por %p70, %p71
      %p73 = scmp.ne.s32.totalorder %s59, %s60
      %p74 = scmp.eq.s32.totalorder %s26, 1
      %p75 = por %p73, %p74
      %p77 = scmp.ne.s32.totalorder %s60, %s76
      %p78 = scmp.eq.s32.totalorder %s26, 0
      %p79 = por %p77, %p78
      %s80 = ssub.s32 %s20, %s27
      %p81 = scmp.eq.s32.totalorder %s80, 0
      %s83 = sadd.s32 %s82, 1
      %s84 = scalar_select %p81, %s82, %s83
      %p87 = pneg %p81
      %p88 = scmp.eq.s32.totalorder %s20, 1
      %p89 = por %p87, %p88
      %p90 = scmp.ne.s32.totalorder %s82, %s85
      %p91 = scmp.eq.s32.totalorder %s20, 0
      %p92 = por %p90, %p91
      %p93 = scmp.ne.s32.totalorder %s82, %s85
      %p94 = scmp.eq.s32.totalorder %s25, 1
      %p95 = por %p93, %p94
      %p96 = scmp.ne.s32.totalorder %s85, %s86
      %p97 = scmp.eq.s32.totalorder %s25, 0
      %p98 = por %p96, %p97
      %p99 = scmp.ne.s32.totalorder %s85, %s86
      %p100 = scmp.eq.s32.totalorder %s26, 1
      %p101 = por %p99, %p100
      %p103 = scmp.ne.s32.totalorder %s86, %s102
      %p104 = scmp.eq.s32.totalorder %s26, 0
      %p105 = por %p103, %p104
      %s106 = ssub.s32 %s20, %s27
      %p107 = scmp.eq.s32.totalorder %s106, 0
      %s109 = sadd.s32 %s108, 1
      %s110 = scalar_select %p107, %s108, %s109
      %p113 = pneg %p107
      %p114 = scmp.eq.s32.totalorder %s20, 1
      %p115 = por %p113, %p114
      %p116 = scmp.ne.s32.totalorder %s108, %s111
      %p117 = scmp.eq.s32.totalorder %s20, 0
      %p118 = por %p116, %p117
      %p119 = scmp.ne.s32.totalorder %s108, %s111
      %p120 = scmp.eq.s32.totalorder %s25, 1
      %p121 = por %p119, %p120
      %p122 = scmp.ne.s32.totalorder %s111, %s112
      %p123 = scmp.eq.s32.totalorder %s25, 0
      %p124 = por %p122, %p123
      %p125 = scmp.ne.s32.totalorder %s111, %s112
      %p126 = scmp.eq.s32.totalorder %s26, 1
      %p127 = por %p125, %p126
      %p129 = scmp.ne.s32.totalorder %s112, %s128
      %p130 = scmp.eq.s32.totalorder %s26, 0
      %p131 = por %p129, %p130
      %s133 = sadd.s32 %s132, 1
      %p136 = scmp.eq.s32.totalorder %s20, 1
      %p137 = scmp.ne.s32.totalorder %s132, %s134
      %p138 = scmp.eq.s32.totalorder %s20, 0
      %p139 = por %p137, %p138
      %p140 = scmp.ne.s32.totalorder %s132, %s134
      %p141 = scmp.eq.s32.totalorder %s25, 1
      %p142 = por %p140, %p141
      %p143 = scmp.ne.s32.totalorder %s134, %s135
      %p144 = scmp.eq.s32.totalorder %s25, 0
      %p145 = por %p143, %p144
      %p146 = scmp.ne.s32.totalorder %s134, %s135
      %p147 = scmp.eq.s32.totalorder %s26, 1
      %p148 = por %p146, %p147
      %p150 = scmp.ne.s32.totalorder %s135, %s149
      %p151 = scmp.eq.s32.totalorder %s26, 0
      %p152 = por %p150, %p151
      %s154 = sadd.s32 %s153, 1
      %p157 = scmp.eq.s32.totalorder %s20, 1
      %p158 = scmp.ne.s32.totalorder %s153, %s155
      %p159 = scmp.eq.s32.totalorder %s20, 0
      %p160 = por %p158, %p159
      %p161 = scmp.ne.s32.totalorder %s153, %s155
      %p162 = scmp.eq.s32.totalorder %s25, 1
      %p163 = por %p161, %p162
      %p164 = scmp.ne.s32.totalorder %s155, %s156
      %p165 = scmp.eq.s32.totalorder %s25, 0
      %p166 = por %p164, %p165
      %p167 = scmp.ne.s32.totalorder %s155, %s156
      %p168 = scmp.eq.s32.totalorder %s26, 1
      %p169 = por %p167, %p168
      %p171 = scmp.ne.s32.totalorder %s156, %s170
      %p172 = scmp.eq.s32.totalorder %s26, 0
      %p173 = por %p171, %p172
      %s175 = sadd.s32 %s174, 1
      %p178 = scmp.eq.s32.totalorder %s20, 1
      %p179 = scmp.ne.s32.totalorder %s174, %s176
      %p180 = scmp.eq.s32.totalorder %s20, 0
      %p181 = por %p179, %p180
      %p182 = scmp.ne.s32.totalorder %s174, %s176
      %p183 = scmp.eq.s32.totalorder %s25, 1
      %p184 = por %p182, %p183
      %p185 = scmp.ne.s32.totalorder %s176, %s177
      %p186 = scmp.eq.s32.totalorder %s25, 0
      %p187 = por %p185, %p186
      %p188 = scmp.ne.s32.totalorder %s176, %s177
      %p189 = scmp.eq.s32.totalorder %s26, 1
      %p190 = por %p188, %p189
      %p192 = scmp.ne.s32.totalorder %s177, %s191
      %p193 = scmp.eq.s32.totalorder %s26, 0
      %p194 = por %p192, %p193
      %s196 = sadd.s32 %s195, 1
      %p199 = scmp.eq.s32.totalorder %s20, 1
      %p200 = scmp.ne.s32.totalorder %s195, %s197
      %p201 = scmp.eq.s32.totalorder %s20, 0
      %p202 = por %p200, %p201
      %p203 = scmp.ne.s32.totalorder %s195, %s197
      %p204 = scmp.eq.s32.totalorder %s25, 1
      %p205 = por %p203, %p204
      %p206 = scmp.ne.s32.totalorder %s197, %s198
      %p207 = scmp.eq.s32.totalorder %s25, 0
      %p208 = por %p206, %p207
      %p209 = scmp.ne.s32.totalorder %s197, %s198
      %p210 = scmp.eq.s32.totalorder %s26, 1
      %p211 = por %p209, %p210
      %p213 = scmp.ne.s32.totalorder %s198, %s212
      %p214 = scmp.eq.s32.totalorder %s26, 0
      %p215 = por %p213, %p214
      %s217 = sadd.s32 %s216, 1
      %p220 = scmp.eq.s32.totalorder %s20, 1
      %p221 = scmp.ne.s32.totalorder %s216, %s218
      %p222 = scmp.eq.s32.totalorder %s20, 0
      %p223 = por %p221, %p222
      %p224 = scmp.ne.s32.totalorder %s216, %s218
      %p225 = scmp.eq.s32.totalorder %s25, 1
      %p226 = por %p224, %p225
      %p227 = scmp.ne.s32.totalorder %s218, %s219
      %p228 = scmp.eq.s32.totalorder %s25, 0
      %p229 = por %p227, %p228
      %p230 = scmp.ne.s32.totalorder %s218, %s219
      %p231 = scmp.eq.s32.totalorder %s26, 1
      %p232 = por %p230, %p231
      %p234 = scmp.ne.s32.totalorder %s219, %s233
      %p235 = scmp.eq.s32.totalorder %s26, 0
      %p236 = por %p234, %p235
      %s238 = sadd.s32 %s237, 1
      %p241 = scmp.eq.s32.totalorder %s20, 1
      %p242 = scmp.ne.s32.totalorder %s237, %s239
      %p243 = scmp.eq.s32.totalorder %s20, 0
      %p244 = por %p242, %p243
      %p245 = scmp.ne.s32.totalorder %s237, %s239
      %p246 = scmp.eq.s32.totalorder %s25, 1
      %p247 = por %p245, %p246
      %p248 = scmp.ne.s32.totalorder %s239, %s240
      %p249 = scmp.eq.s32.totalorder %s25, 0
      %p250 = por %p248, %p249
      %p251 = scmp.ne.s32.totalorder %s239, %s240
      %p252 = scmp.eq.s32.totalorder %s26, 1
      %p253 = por %p251, %p252
      %p255 = scmp.ne.s32.totalorder %s240, %s254
      %p256 = scmp.eq.s32.totalorder %s26, 0
      %p257 = por %p255, %p256
      %s258 = ssub.s32 %s20, %s27
      %p259 = scmp.eq.s32.totalorder %s258, 0
      %s261 = sadd.s32 %s260, 1
      %s262 = scalar_select %p259, %s260, %s261
      %p265 = pneg %p259
      %p266 = scmp.eq.s32.totalorder %s20, 1
      %p267 = por %p265, %p266
      %p268 = scmp.ne.s32.totalorder %s260, %s263
      %p269 = scmp.eq.s32.totalorder %s20, 0
      %p270 = por %p268, %p269
      %p271 = scmp.ne.s32.totalorder %s260, %s263
      %p272 = scmp.eq.s32.totalorder %s25, 1
      %p273 = por %p271, %p272
      %p274 = scmp.ne.s32.totalorder %s263, %s264
      %p275 = scmp.eq.s32.totalorder %s25, 0
      %p276 = por %p274, %p275
      %p277 = scmp.ne.s32.totalorder %s263, %s264
      %p278 = scmp.eq.s32.totalorder %s26, 1
      %p279 = por %p277, %p278
      %p281 = scmp.ne.s32.totalorder %s264, %s280
      %p282 = scmp.eq.s32.totalorder %s26, 0
      %p283 = por %p281, %p282
      %p284 = scmp.le.s32.totalorder 1, %s20
      %p285 = scmp.lt.s32.totalorder %s20, 3
      %p286 = pnand %p284, %p285
      %p287 = pneg %p286
      // Predicated region
      $region9: #{tpu_custom_call.1} parent=5 // pred_check
        _
      $region10: #{tpu_custom_call.1} parent=5 // pred_check_branch
        %289 = sbr.rel (%p286) target = $region12
      $region11: #{tpu_custom_call.1} parent=5 // pred_region
        %s290 = ssub.s32 %s20, 1
        // Predicated region
        $region13: #{tpu_custom_call.1} parent=11 // pred_check
          %p291 = pneg %p145
        $region14: #{tpu_custom_call.1} parent=11 // pred_check_branch
          %293 = sbr.rel (%p291) target = $region16
        $region15: #{tpu_custom_call.1} parent=11 // pred_region
          %s295 = ssub.s32 8192, 8192
          %296 = vsyncadd [#allocation3], %s295
          %s297 = sshll.u32 [#allocation2], 4
          %s298 = int_to_ptr.vmem [resolvable:$true] %s297
          %303 = dma.hbm_to_vmem [thread:$0]  %s4, 8192, %s298, [#allocation3], 256, 256, 16
        $region16: #{tpu_custom_call.1} parent=11 // pred_fallthru
          _
        // Predicated region
        $region17: #{tpu_custom_call.1} parent=11 // pred_check
          %p304 = pneg %p166
        $region18: #{tpu_custom_call.1} parent=11 // pred_check_branch
          %306 = sbr.rel (%p304) target = $region20
        $region19: #{tpu_custom_call.1} parent=11 // pred_region
          _
        $region20: #{tpu_custom_call.1} parent=11 // pred_fallthru
          _
        // Predicated region
        $region21: #{tpu_custom_call.1} parent=11 // pred_check
          %p307 = pneg %p187
        $region22: #{tpu_custom_call.1} parent=11 // pred_check_branch
          %309 = sbr.rel (%p307) target = $region24
        $region23: #{tpu_custom_call.1} parent=11 // pred_region
          _
        $region24: #{tpu_custom_call.1} parent=11 // pred_fallthru
          _
        // Predicated region
        $region25: #{tpu_custom_call.1} parent=11 // pred_check
          %p310 = pneg %p208
        $region26: #{tpu_custom_call.1} parent=11 // pred_check_branch
          %312 = sbr.rel (%p310) target = $region28
        $region27: #{tpu_custom_call.1} parent=11 // pred_region
          _
        $region28: #{tpu_custom_call.1} parent=11 // pred_fallthru
          _
        // Predicated region
        $region29: #{tpu_custom_call.1} parent=11 // pred_check
          %p313 = pneg %p229
        $region30: #{tpu_custom_call.1} parent=11 // pred_check_branch
          %315 = sbr.rel (%p313) target = $region32
        $region31: #{tpu_custom_call.1} parent=11 // pred_region
          _
        $region32: #{tpu_custom_call.1} parent=11 // pred_fallthru
          _
        // Predicated region
        $region33: #{tpu_custom_call.1} parent=11 // pred_check
          %p316 = pneg %p250
        $region34: #{tpu_custom_call.1} parent=11 // pred_check_branch
          %318 = sbr.rel (%p316) target = $region36
        $region35: #{tpu_custom_call.1} parent=11 // pred_region
          _
        $region36: #{tpu_custom_call.1} parent=11 // pred_fallthru
          _
      $region12: #{tpu_custom_call.1} parent=5 // pred_fallthru
        _
      %p319 = scmp.lt.s32.totalorder %s20, 2
      // Predicated region
      $region37: #{tpu_custom_call.1} parent=5 // pred_check
        %p320 = pneg %p319
      $region38: #{tpu_custom_call.1} parent=5 // pred_check_branch
        %322 = sbr.rel (%p320) target = $region40
      $region39: #{tpu_custom_call.1} parent=5 // pred_region
        // Predicated region
        $region41: #{tpu_custom_call.1} parent=39 // pred_check
          %p323 = pneg %p40
        $region42: #{tpu_custom_call.1} parent=39 // pred_check_branch
          %325 = sbr.rel (%p323) target = $region44
        $region43: #{tpu_custom_call.1} parent=39 // pred_region
          %s326 = smul.u32 6, %s20
          %p327 = scmp.lt.s32.totalorder %s326, 11
          %s328 = scalar_select %p327, %s326, 11
          %s329 = smul.addr %s328, 2
          %s330 = smul.addr %s329, 8
          %s331 = scalar_lea.vmem %s0, %s330
          %s332 = smul.u32 6, %s20
        $region44: #{tpu_custom_call.1} parent=39 // pred_fallthru
          _
        // Predicated region
        $region45: #{tpu_custom_call.1} parent=39 // pred_check
          %p333 = pneg %p66
        $region46: #{tpu_custom_call.1} parent=39 // pred_check_branch
          %335 = sbr.rel (%p333) target = $region48
        $region47: #{tpu_custom_call.1} parent=39 // pred_region
          %s336 = smul.u32 6, %s20
          %p337 = scmp.lt.s32.totalorder %s336, 11
          %s338 = scalar_select %p337, %s336, 11
          %s339 = smul.addr %s338, 8
          %s340 = scalar_lea.vmem %s1, %s339
          %s341 = smul.u32 6, %s20
        $region48: #{tpu_custom_call.1} parent=39 // pred_fallthru
          _
        // Predicated region
        $region49: #{tpu_custom_call.1} parent=39 // pred_check
          %p342 = pneg %p92
        $region50: #{tpu_custom_call.1} parent=39 // pred_check_branch
          %344 = sbr.rel (%p342) target = $region52
        $region51: #{tpu_custom_call.1} parent=39 // pred_region
          %s345 = smul.u32 6, %s20
          %p346 = scmp.lt.s32.totalorder %s345, 11
          %s347 = scalar_select %p346, %s345, 11
          %s348 = smul.addr %s347, 8
          %s349 = scalar_lea.vmem %s2, %s348
          %s350 = smul.u32 6, %s20
        $region52: #{tpu_custom_call.1} parent=39 // pred_fallthru
          _
        // Predicated region
        $region53: #{tpu_custom_call.1} parent=39 // pred_check
          %p351 = pneg %p118
        $region54: #{tpu_custom_call.1} parent=39 // pred_check_branch
          %353 = sbr.rel (%p351) target = $region56
        $region55: #{tpu_custom_call.1} parent=39 // pred_region
          %s354 = smul.u32 6, %s20
          %p355 = scmp.lt.s32.totalorder %s354, 11
          %s356 = scalar_select %p355, %s354, 11
          %s357 = smul.addr %s356, 8
          %s358 = scalar_lea.vmem %s3, %s357
          %s359 = smul.u32 6, %s20
        $region56: #{tpu_custom_call.1} parent=39 // pred_fallthru
          _
      $region40: #{tpu_custom_call.1} parent=5 // pred_fallthru
        _
      %p360 = scmp.le.s32.totalorder 1, %s20
      %p361 = scmp.lt.s32.totalorder %s20, 3
      %p362 = pnand %p360, %p361
      %p363 = pneg %p362
      // Predicated region
      $region57: #{tpu_custom_call.1} parent=5 // pred_check
        _
      $region58: #{tpu_custom_call.1} parent=5 // pred_check_branch
        %365 = sbr.rel (%p362) target = $region60
      $region59: #{tpu_custom_call.1} parent=5 // pred_region
        %s366 = ssub.s32 %s20, 1
        // Predicated region
        $region61: #{tpu_custom_call.1} parent=59 // pred_check
          %p367 = pneg %p145
        $region62: #{tpu_custom_call.1} parent=59 // pred_check_branch
          %369 = sbr.rel (%p367) target = $region64
        $region63: #{tpu_custom_call.1} parent=59 // pred_region
          %370 = dma.done [#allocation3], 8192
        $region64: #{tpu_custom_call.1} parent=59 // pred_fallthru
          _
        %s371 = smul.u32 6, %s25
        %p372 = scmp.lt.s32.totalorder %s371, 11
        %s373 = scalar_select %p372, %s371, 11
        %s374 = smul.addr %s373, 2
        %s375 = smul.addr %s374, 8
        %s376 = scalar_lea.vmem %s0, %s375
        %p377 = pneg %p46
        %p378 = pneg %p43
        %s379 = smul.u32 6, %s25
        %p380 = scmp.lt.s32.totalorder %s379, 11
        %s381 = scalar_select %p380, %s379, 11
        %s382 = smul.addr %s381, 8
        %s383 = scalar_lea.vmem %s1, %s382
        %p384 = pneg %p72
        %p385 = pneg %p69
        %s386 = smul.u32 6, %s25
        %p387 = scmp.lt.s32.totalorder %s386, 11
        %s388 = scalar_select %p387, %s386, 11
        %s389 = smul.addr %s388, 8
        %s390 = scalar_lea.vmem %s2, %s389
        %p391 = pneg %p98
        %p392 = pneg %p95
        %s393 = smul.u32 6, %s25
        %p394 = scmp.lt.s32.totalorder %s393, 11
        %s395 = scalar_select %p394, %s393, 11
        %s396 = smul.addr %s395, 8
        %s397 = scalar_lea.vmem %s3, %s396
        %p398 = pneg %p124
        %p399 = pneg %p121
        %p400 = pneg %p145
        %p401 = pneg %p142
        %p402 = pneg %p166
        %p403 = pneg %p163
        %p404 = pneg %p187
        %p405 = pneg %p184
        %p406 = pneg %p208
        %p407 = pneg %p205
        %p408 = pneg %p229
        %p409 = pneg %p226
        %p410 = pneg %p250
        %p411 = pneg %p247
        %p412 = pneg %p276
        %p413 = pneg %p273
        %s414 = sand.u32 %s263, 1
        %s415 = scalar_lea.sflag [#allocation4], %s414
        %s416 = sand.u32 %s263, 1
        %s417 = smul.addr %s416, 32
        %s418 = scalar_lea.vmem [#allocation5], %s417
        %s419 = smul.u32 6, %s25
        %p420 = scmp.lt.s32.totalorder %s419, 11
        %s421 = scalar_select %p420, %s419, 11
        %s422 = smul.addr %s421, 2
        %s423 = smul.addr %s422, 8
        %s424 = scalar_lea.vmem %s0, %s423
        %s425 = smul.u32 6, %s25
        %s426 = smul.u32 6, %s25
        %p427 = scmp.lt.s32.totalorder %s426, 11
        %s428 = scalar_select %p427, %s426, 11
        %s429 = smul.addr %s428, 8
        %s430 = scalar_lea.vmem %s1, %s429
        %s431 = smul.u32 6, %s25
        %s432 = smul.u32 6, %s25
        %p433 = scmp.lt.s32.totalorder %s432, 11
        %s434 = scalar_select %p433, %s432, 11
        %s435 = smul.addr %s434, 8
        %s436 = scalar_lea.vmem %s2, %s435
        %s437 = smul.u32 6, %s25
        %s438 = smul.u32 6, %s25
        %p439 = scmp.lt.s32.totalorder %s438, 11
        %s440 = scalar_select %p439, %s438, 11
        %s441 = smul.addr %s440, 8
        %s442 = scalar_lea.vmem %s3, %s441
        %s443 = smul.u32 6, %s25
        %s444 = smul.u32 2, %s25
        %v445 = vld [vmem:[%s424] sm:$0xff]
        %v446 = vld [vmem:[%s424 + $0x8] sm:$0xff]
        %v447 = vld [vmem:[%s424 + $0x10] sm:$0xff]
        %v448 = vld [vmem:[%s424 + $0x18] sm:$0xff]
        %v449 = vld [vmem:[%s424 + $0x20] sm:$0xff]
        %v450 = vld [vmem:[%s424 + $0x28] sm:$0xff]
        %v451 = vld [vmem:[%s424 + $0x30] sm:$0xff]
        %v452 = vld [vmem:[%s424 + $0x38] sm:$0xff]
        %v453 = vld [vmem:[%s424 + $0x40] sm:$0xff]
        %v454 = vld [vmem:[%s424 + $0x48] sm:$0xff]
        %v455 = vld [vmem:[%s424 + $0x50] sm:$0xff]
        %v456 = vld [vmem:[%s424 + $0x58] sm:$0xff]
        %v457 = vld [vmem:[#allocation2] sm:$0xff]
        %v458 = vld [vmem:[#allocation2 + $0x8] sm:$0xff]
        %v459 = vld [vmem:[#allocation2 + $0x10] sm:$0xff]
        %v460 = vld [vmem:[#allocation2 + $0x18] sm:$0xff]
        %v461 = vld [vmem:[#allocation2 + $0x20] sm:$0xff]
        %v462 = vld [vmem:[#allocation2 + $0x28] sm:$0xff]
        %v463 = vld [vmem:[#allocation2 + $0x30] sm:$0xff]
        %v464 = vld [vmem:[#allocation2 + $0x38] sm:$0xff]
        %v465 = vld [vmem:[#allocation2 + $0x40] sm:$0xff]
        %v466 = vld [vmem:[#allocation2 + $0x48] sm:$0xff]
        %v467 = vld [vmem:[#allocation2 + $0x50] sm:$0xff]
        %v468 = vld [vmem:[#allocation2 + $0x58] sm:$0xff]
        %v469 = vld [vmem:[#allocation2 + $0x60] sm:$0xff]
        %v470 = vld [vmem:[#allocation2 + $0x68] sm:$0xff]
        %v471 = vld [vmem:[#allocation2 + $0x70] sm:$0xff]
        %v472 = vld [vmem:[#allocation2 + $0x78] sm:$0xff]
        %v473 = vld [vmem:[#allocation2 + $0x80] sm:$0xff]
        %v474 = vld [vmem:[#allocation2 + $0x88] sm:$0xff]
        %v475 = vld [vmem:[#allocation2 + $0x90] sm:$0xff]
        %v476 = vld [vmem:[#allocation2 + $0x98] sm:$0xff]
        %v477 = vld [vmem:[#allocation2 + $0xa0] sm:$0xff]
        %v478 = vld [vmem:[#allocation2 + $0xa8] sm:$0xff]
        %v479 = vld [vmem:[#allocation2 + $0xb0] sm:$0xff]
        %v480 = vld [vmem:[#allocation2 + $0xb8] sm:$0xff]
        %v481 = vld [vmem:[#allocation2 + $0xc0] sm:$0xff]
        %v482 = vld [vmem:[#allocation2 + $0xc8] sm:$0xff]
        %v483 = vld [vmem:[#allocation2 + $0xd0] sm:$0xff]
        %v484 = vld [vmem:[#allocation2 + $0xd8] sm:$0xff]
        %v485 = vld [vmem:[#allocation2 + $0xe0] sm:$0xff]
        %v486 = vld [vmem:[#allocation2 + $0xe8] sm:$0xff]
        %v487 = vld [vmem:[#allocation2 + $0xf0] sm:$0xff]
        %v488 = vld [vmem:[#allocation2 + $0xf8] sm:$0xff]
        %v489 = vld [vmem:[#allocation2 + $0x100] sm:$0xff]
        %v490 = vld [vmem:[#allocation2 + $0x108] sm:$0xff]
        %v491 = vld [vmem:[#allocation2 + $0x110] sm:$0xff]
        %v492 = vld [vmem:[#allocation2 + $0x118] sm:$0xff]
        %v493 = vld [vmem:[#allocation2 + $0x120] sm:$0xff]
        %v494 = vld [vmem:[#allocation2 + $0x128] sm:$0xff]
        %v495 = vld [vmem:[#allocation2 + $0x130] sm:$0xff]
        %v496 = vld [vmem:[#allocation2 + $0x138] sm:$0xff]
        %v497 = vld [vmem:[#allocation2 + $0x140] sm:$0xff]
        %v498 = vld [vmem:[#allocation2 + $0x148] sm:$0xff]
        %v499 = vld [vmem:[#allocation2 + $0x150] sm:$0xff]
        %v500 = vld [vmem:[#allocation2 + $0x158] sm:$0xff]
        %v501 = vld [vmem:[#allocation2 + $0x160] sm:$0xff]
        %v502 = vld [vmem:[#allocation2 + $0x168] sm:$0xff]
        %v503 = vld [vmem:[#allocation2 + $0x170] sm:$0xff]
        %v504 = vld [vmem:[#allocation2 + $0x178] sm:$0xff]
        %v505 = vld [vmem:[#allocation2 + $0x180] sm:$0xff]
        %v506 = vld [vmem:[#allocation2 + $0x188] sm:$0xff]
        %v507 = vld [vmem:[#allocation2 + $0x190] sm:$0xff]
        %v508 = vld [vmem:[#allocation2 + $0x198] sm:$0xff]
        %v509 = vld [vmem:[#allocation2 + $0x1a0] sm:$0xff]
        %v510 = vld [vmem:[#allocation2 + $0x1a8] sm:$0xff]
        %v511 = vld [vmem:[#allocation2 + $0x1b0] sm:$0xff]
        %v512 = vld [vmem:[#allocation2 + $0x1b8] sm:$0xff]
        %v513 = vld [vmem:[#allocation2 + $0x1c0] sm:$0xff]
        %v514 = vld [vmem:[#allocation2 + $0x1c8] sm:$0xff]
        %v515 = vld [vmem:[#allocation2 + $0x1d0] sm:$0xff]
        %v516 = vld [vmem:[#allocation2 + $0x1d8] sm:$0xff]
        %v517 = vld [vmem:[#allocation2 + $0x1e0] sm:$0xff]
        %v518 = vld [vmem:[#allocation2 + $0x1e8] sm:$0xff]
        %v519 = vld [vmem:[#allocation2 + $0x1f0] sm:$0xff]
        %v520 = vld [vmem:[#allocation2 + $0x1f8] sm:$0xff]
        %v521 = vld [vmem:[%s430] sm:$0xff]
        %v522 = vld [vmem:[%s430 + $0x8] sm:$0xff]
        %v523 = vld [vmem:[%s430 + $0x10] sm:$0xff]
        %v524 = vld [vmem:[%s430 + $0x18] sm:$0xff]
        %v525 = vld [vmem:[%s430 + $0x20] sm:$0xff]
        %v526 = vld [vmem:[%s430 + $0x28] sm:$0xff]
        %v527 = vld [vmem:[%s5] sm:$0xff]
        %v528 = vld [vmem:[%s5 + $0x8] sm:$0xff]
        %v529 = vld [vmem:[%s5 + $0x10] sm:$0xff]
        %v530 = vld [vmem:[%s5 + $0x18] sm:$0xff]
        %v531 = vld [vmem:[%s5 + $0x20] sm:$0xff]
        %v532 = vld [vmem:[%s5 + $0x28] sm:$0xff]
        %v533 = vld [vmem:[%s5 + $0x30] sm:$0xff]
        %v534 = vld [vmem:[%s5 + $0x38] sm:$0xff]
        %v535 = vld [vmem:[%s5 + $0x40] sm:$0xff]
        %v536 = vld [vmem:[%s5 + $0x48] sm:$0xff]
        %v537 = vld [vmem:[%s5 + $0x50] sm:$0xff]
        %v538 = vld [vmem:[%s5 + $0x58] sm:$0xff]
        %v539 = vld [vmem:[%s5 + $0x60] sm:$0xff]
        %v540 = vld [vmem:[%s5 + $0x68] sm:$0xff]
        %v541 = vld [vmem:[%s5 + $0x70] sm:$0xff]
        %v542 = vld [vmem:[%s5 + $0x78] sm:$0xff]
        %vm543 = vcmask 523264
        %v545 = vsel %vm543, %v521, 0
        %v548 = vsel %vm543, %v522, 0
        %v551 = vsel %vm543, %v523, 0
        %v554 = vsel %vm543, %v524, 0
        %v557 = vsel %vm543, %v525, 0
        %v560 = vsel %vm543, %v526, 0
        %562 = vmatprep.subr.mxu0 %v528
        %563 = vmatpush1.msra.mxu0 %v527
        %564 = vmatprep.subr.mxu0 %v530
        %565 = vmatpush1.msra.mxu0 %v529
        %566 = vmatprep.subr.mxu0 %v532
        %567 = vmatpush1.msra.mxu0 %v531
        %568 = vmatprep.subr.mxu0 %v534
        %569 = vmatpush1.msra.mxu0 %v533
        %570 = vmatprep.subr.mxu0 %v536
        %571 = vmatpush1.msra.mxu0 %v535
        %572 = vmatprep.subr.mxu0 %v538
        %573 = vmatpush1.msra.mxu0 %v537
        %574 = vmatprep.subr.mxu0 %v540
        %575 = vmatpush1.msra.mxu0 %v539
        %576 = vmatprep.subr.mxu0 %v542
        %577 = vmatpush1.msra.mxu0 %v541
        %578 = vmatprep.subr.mxu0 0.0
        %579 = vmatpush1.msra.mxu0 0.0
        %580 = vmatprep.subr.mxu0 0.0
        %581 = vmatpush1.msra.mxu0 0.0
        %582 = vmatprep.subr.mxu0 0.0
        %583 = vmatpush1.msra.mxu0 0.0
        %584 = vmatprep.subr.mxu0 0.0
        %585 = vmatpush1.msra.mxu0 0.0
        %586 = vmatprep.subr.mxu0 0.0
        %587 = vmatpush1.msra.mxu0 0.0
        %588 = vmatprep.subr.mxu0 0.0
        %589 = vmatpush1.msra.mxu0 0.0
        %590 = vmatprep.subr.mxu0 0.0
        %591 = vmatpush1.msra.mxu0 0.0
        %592 = vmatprep.subr.mxu0 0.0
        %593 = vmatpush1.msra.mxu0 0.0
        %594 = vmatprep.subr.mxu0 0.0
        %595 = vmatpush1.msra.mxu0 0.0
        %596 = vmatprep.subr.mxu0 0.0
        %597 = vmatpush1.msra.mxu0 0.0
        %598 = vmatprep.subr.mxu0 0.0
        %599 = vmatpush1.msra.mxu0 0.0
        %600 = vmatprep.subr.mxu0 0.0
        %601 = vmatpush1.msra.mxu0 0.0
        %602 = vmatprep.subr.mxu0 0.0
        %603 = vmatpush1.msra.mxu0 0.0
        %604 = vmatprep.subr.mxu0 0.0
        %605 = vmatpush1.msra.mxu0 0.0
        %606 = vmatprep.subr.mxu0 0.0
        %607 = vmatpush1.msra.mxu0 0.0
        %608 = vmatprep.subr.mxu0 0.0
        %609 = vmatpush1.msra.mxu0 0.0
        %610 = vmatprep.subr.mxu0 0.0
        %611 = vmatpush1.msra.mxu0 0.0
        %612 = vmatprep.subr.mxu0 0.0
        %613 = vmatpush1.msra.mxu0 0.0
        %614 = vmatprep.subr.mxu0 0.0
        %615 = vmatpush1.msra.mxu0 0.0
        %616 = vmatprep.subr.mxu0 0.0
        %617 = vmatpush1.msra.mxu0 0.0
        %618 = vmatprep.subr.mxu0 0.0
        %619 = vmatpush1.msra.mxu0 0.0
        %620 = vmatprep.subr.mxu0 0.0
        %621 = vmatpush1.msra.mxu0 0.0
        %622 = vmatprep.subr.mxu0 0.0
        %623 = vmatpush1.msra.mxu0 0.0
        %624 = vmatprep.subr.mxu0 0.0
        %625 = vmatpush1.msra.mxu0 0.0
        %626 = vmatprep.mubr.f32.mxu0 0.0
        %627 = vmatmul.mubr.f32.gmra.mrb[0].mxu0 %v545
        %v628 = vpop.f32.mrb[0].mxu0
        %v629 = vadd.f32 0.0, %v628
        %v630 = vpop.f32.mrb[0].mxu0
        %v631 = vadd.f32 0.0, %v630
        %632 = vmatprep.mubr.f32.mxu0 0.0
        %633 = vmatmul.mubr.f32.gmra.mrb[0].mxu0 %v548
        %v634 = vpop.f32.mrb[0].mxu0
        %v635 = vadd.f32 0.0, %v634
        %v636 = vpop.f32.mrb[0].mxu0
        %v637 = vadd.f32 0.0, %v636
        %638 = vmatprep.mubr.f32.mxu0 0.0
        %639 = vmatmul.mubr.f32.gmra.mrb[0].mxu0 %v551
        %v640 = vpop.f32.mrb[0].mxu0
        %v641 = vadd.f32 0.0, %v640
        %v642 = vpop.f32.mrb[0].mxu0
        %v643 = vadd.f32 0.0, %v642
        %644 = vmatprep.mubr.f32.mxu0 0.0
        %645 = vmatmul.mubr.f32.gmra.mrb[0].mxu0 %v554
        %v646 = vpop.f32.mrb[0].mxu0
        %v647 = vadd.f32 0.0, %v646
        %v648 = vpop.f32.mrb[0].mxu0
        %v649 = vadd.f32 0.0, %v648
        %650 = vmatprep.mubr.f32.mxu0 0.0
        %651 = vmatmul.mubr.f32.gmra.mrb[0].mxu0 %v557
        %v652 = vpop.f32.mrb[0].mxu0
        %v653 = vadd.f32 0.0, %v652
        %v654 = vpop.f32.mrb[0].mxu0
        %v655 = vadd.f32 0.0, %v654
        %656 = vmatprep.mubr.f32.mxu0 0.0
        %657 = vmatmul.mubr.f32.gmra.mrb[0].mxu0 %v560
        %v658 = vpop.f32.mrb[0].mxu0
        %v659 = vadd.f32 0.0, %v658
        %v660 = vpop.f32.mrb[0].mxu0
        %v661 = vadd.f32 0.0, %v660
        %662 = vdwg.mxu0
        %663 = vmatprep.subr.mxu0 %v458
        %664 = vmatpush1.msra.mxu0 %v457
        %665 = vmatprep.subr.mxu0 %v460
        %666 = vmatpush1.msra.mxu0 %v459
        %667 = vmatprep.subr.mxu0 %v462
        %668 = vmatpush1.msra.mxu0 %v461
        %669 = vmatprep.subr.mxu0 %v464
        %670 = vmatpush1.msra.mxu0 %v463
        %671 = vmatprep.subr.mxu0 %v466
        %672 = vmatpush1.msra.mxu0 %v465
        %673 = vmatprep.subr.mxu0 %v468
        %674 = vmatpush1.msra.mxu0 %v467
        %675 = vmatprep.subr.mxu0 %v470
        %676 = vmatpush1.msra.mxu0 %v469
        %677 = vmatprep.subr.mxu0 %v472
        %678 = vmatpush1.msra.mxu0 %v471
        %679 = vmatprep.subr.mxu0 %v474
        %680 = vmatpush1.msra.mxu0 %v473
        %681 = vmatprep.subr.mxu0 %v476
        %682 = vmatpush1.msra.mxu0 %v475
        %683 = vmatprep.subr.mxu0 %v478
        %684 = vmatpush1.msra.mxu0 %v477
        %685 = vmatprep.subr.mxu0 %v480
        %686 = vmatpush1.msra.mxu0 %v479
        %687 = vmatprep.subr.mxu0 %v482
        %688 = vmatpush1.msra.mxu0 %v481
        %689 = vmatprep.subr.mxu0 %v484
        %690 = vmatpush1.msra.mxu0 %v483
        %691 = vmatprep.subr.mxu0 %v486
        %692 = vmatpush1.msra.mxu0 %v485
        %693 = vmatprep.subr.mxu0 %v488
        %694 = vmatpush1.msra.mxu0 %v487
        %695 = vmatprep.subr.mxu0 %v490
        %696 = vmatpush1.msra.mxu0 %v489
        %697 = vmatprep.subr.mxu0 %v492
        %698 = vmatpush1.msra.mxu0 %v491
        %699 = vmatprep.subr.mxu0 %v494
        %700 = vmatpush1.msra.mxu0 %v493
        %701 = vmatprep.subr.mxu0 %v496
        %702 = vmatpush1.msra.mxu0 %v495
        %703 = vmatprep.subr.mxu0 %v498
        %704 = vmatpush1.msra.mxu0 %v497
        %705 = vmatprep.subr.mxu0 %v500
        %706 = vmatpush1.msra.mxu0 %v499
        %707 = vmatprep.subr.mxu0 %v502
        %708 = vmatpush1.msra.mxu0 %v501
        %709 = vmatprep.subr.mxu0 %v504
        %710 = vmatpush1.msra.mxu0 %v503
        %711 = vmatprep.subr.mxu0 %v506
        %712 = vmatpush1.msra.mxu0 %v505
        %713 = vmatprep.subr.mxu0 %v508
        %714 = vmatpush1.msra.mxu0 %v507
        %715 = vmatprep.subr.mxu0 %v510
        %716 = vmatpush1.msra.mxu0 %v509
        %717 = vmatprep.subr.mxu0 %v512
        %718 = vmatpush1.msra.mxu0 %v511
        %719 = vmatprep.subr.mxu0 %v514
        %720 = vmatpush1.msra.mxu0 %v513
        %721 = vmatprep.subr.mxu0 %v516
        %722 = vmatpush1.msra.mxu0 %v515
        %723 = vmatprep.subr.mxu0 %v518
        %724 = vmatpush1.msra.mxu0 %v517
        %725 = vmatprep.subr.mxu0 %v520
        %726 = vmatpush1.msra.mxu0 %v519
        %727 = vmatprep.mubr.f32.mxu0 %v446
        %728 = vmatmul.mubr.f32.gmra.mrb[0].mxu0 %v445
        %v729 = vpop.f32.mrb[0].mxu0
        %v730 = vadd.f32 %v629, %v729
        %v731 = vpop.f32.mrb[0].mxu0
        %v732 = vadd.f32 %v631, %v731
        %733 = vmatprep.mubr.f32.mxu0 %v448
        %734 = vmatmul.mubr.f32.gmra.mrb[0].mxu0 %v447
        %v735 = vpop.f32.mrb[0].mxu0
        %v736 = vadd.f32 %v635, %v735
        %v737 = vpop.f32.mrb[0].mxu0
        %v738 = vadd.f32 %v637, %v737
        %739 = vmatprep.mubr.f32.mxu0 %v450
        %740 = vmatmul.mubr.f32.gmra.mrb[0].mxu0 %v449
        %v741 = vpop.f32.mrb[0].mxu0
        %v742 = vadd.f32 %v641, %v741
        %v743 = vpop.f32.mrb[0].mxu0
        %v744 = vadd.f32 %v643, %v743
        %745 = vmatprep.mubr.f32.mxu0 %v452
        %746 = vmatmul.mubr.f32.gmra.mrb[0].mxu0 %v451
        %v747 = vpop.f32.mrb[0].mxu0
        %v748 = vadd.f32 %v647, %v747
        %v749 = vpop.f32.mrb[0].mxu0
        %v750 = vadd.f32 %v649, %v749
        %751 = vmatprep.mubr.f32.mxu0 %v454
        %752 = vmatmul.mubr.f32.gmra.mrb[0].mxu0 %v453
        %v753 = vpop.f32.mrb[0].mxu0
        %v754 = vadd.f32 %v653, %v753
        %v755 = vpop.f32.mrb[0].mxu0
        %v756 = vadd.f32 %v655, %v755
        %757 = vmatprep.mubr.f32.mxu0 %v456
        %758 = vmatmul.mubr.f32.gmra.mrb[0].mxu0 %v455
        %v759 = vpop.f32.mrb[0].mxu0
        %v760 = vadd.f32 %v659, %v759
        %v761 = vpop.f32.mrb[0].mxu0
        %v762 = vadd.f32 %v661, %v761
        %763 = vdwg.mxu0
        %v764 = vld [vmem:[%s436] sm:$0xff]
        %v765 = vld [vmem:[%s436 + $0x8] sm:$0xff]
        %v766 = vld [vmem:[%s436 + $0x10] sm:$0xff]
        %v767 = vld [vmem:[%s436 + $0x18] sm:$0xff]
        %v768 = vld [vmem:[%s436 + $0x20] sm:$0xff]
        %v769 = vld [vmem:[%s436 + $0x28] sm:$0xff]
        %v770 = vld [vmem:[%s6] sm:$0xff]
        %v771 = vld [vmem:[%s6 + $0x8] sm:$0xff]
        %v772 = vld [vmem:[%s6 + $0x10] sm:$0xff]
        %v773 = vld [vmem:[%s6 + $0x18] sm:$0xff]
        %vm774 = vcmask 130048
        %v776 = vsel %vm774, %v764, 0
        %v779 = vsel %vm774, %v765, 0
        %v782 = vsel %vm774, %v766, 0
        %v785 = vsel %vm774, %v767, 0
        %v788 = vsel %vm774, %v768, 0
        %v791 = vsel %vm774, %v769, 0
        %793 = vmatprep.subr.mxu0 %v771
        %794 = vmatpush1.msra.mxu0 %v770
        %795 = vmatprep.subr.mxu0 %v773
        %796 = vmatpush1.msra.mxu0 %v772
        %797 = vmatprep.subr.mxu0 0.0
        %798 = vmatpush1.msra.mxu0 0.0
        %799 = vmatprep.subr.mxu0 0.0
        %800 = vmatpush1.msra.mxu0 0.0
        %801 = vmatprep.subr.mxu0 0.0
        %802 = vmatpush1.msra.mxu0 0.0
        %803 = vmatprep.subr.mxu0 0.0
        %804 = vmatpush1.msra.mxu0 0.0
        %805 = vmatprep.subr.mxu0 0.0
        %806 = vmatpush1.msra.mxu0 0.0
        %807 = vmatprep.subr.mxu0 0.0
        %808 = vmatpush1.msra.mxu0 0.0
        %809 = vmatprep.subr.mxu0 0.0
        %810 = vmatpush1.msra.mxu0 0.0
        %811 = vmatprep.subr.mxu0 0.0
        %812 = vmatpush1.msra.mxu0 0.0
        %813 = vmatprep.subr.mxu0 0.0
        %814 = vmatpush1.msra.mxu0 0.0
        %815 = vmatprep.subr.mxu0 0.0
        %816 = vmatpush1.msra.mxu0 0.0
        %817 = vmatprep.subr.mxu0 0.0
        %818 = vmatpush1.msra.mxu0 0.0
        %819 = vmatprep.subr.mxu0 0.0
        %820 = vmatpush1.msra.mxu0 0.0
        %821 = vmatprep.subr.mxu0 0.0
        %822 = vmatpush1.msra.mxu0 0.0
        %823 = vmatprep.subr.mxu0 0.0
        %824 = vmatpush1.msra.mxu0 0.0
        %825 = vmatprep.subr.mxu0 0.0
        %826 = vmatpush1.msra.mxu0 0.0
        %827 = vmatprep.subr.mxu0 0.0
        %828 = vmatpush1.msra.mxu0 0.0
        %829 = vmatprep.subr.mxu0 0.0
        %830 = vmatpush1.msra.mxu0 0.0
        %831 = vmatprep.subr.mxu0 0.0
        %832 = vmatpush1.msra.mxu0 0.0
        %833 = vmatprep.subr.mxu0 0.0
        %834 = vmatpush1.msra.mxu0 0.0
        %835 = vmatprep.subr.mxu0 0.0
        %836 = vmatpush1.msra.mxu0 0.0
        %837 = vmatprep.subr.mxu0 0.0
        %838 = vmatpush1.msra.mxu0 0.0
        %839 = vmatprep.subr.mxu0 0.0
        %840 = vmatpush1.msra.mxu0 0.0
        %841 = vmatprep.subr.mxu0 0.0
        %842 = vmatpush1.msra.mxu0 0.0
        %843 = vmatprep.subr.mxu0 0.0
        %844 = vmatpush1.msra.mxu0 0.0
        %845 = vmatprep.subr.mxu0 0.0
        %846 = vmatpush1.msra.mxu0 0.0
        %847 = vmatprep.subr.mxu0 0.0
        %848 = vmatpush1.msra.mxu0 0.0
        %849 = vmatprep.subr.mxu0 0.0
        %850 = vmatpush1.msra.mxu0 0.0
        %851 = vmatprep.subr.mxu0 0.0
        %852 = vmatpush1.msra.mxu0 0.0
        %853 = vmatprep.subr.mxu0 0.0
        %854 = vmatpush1.msra.mxu0 0.0
        %855 = vmatprep.subr.mxu0 0.0
        %856 = vmatpush1.msra.mxu0 0.0
        %857 = vmatprep.mubr.f32.mxu0 0.0
        %858 = vmatmul.mubr.f32.gmra.mrb[0].mxu0 %v776
        %v859 = vpop.f32.mrb[0].mxu0
        %v860 = vadd.f32 0.0, %v859
        %v861 = vpop.f32.mrb[0].mxu0
        %v862 = vadd.f32 0.0, %v861
        %863 = vmatprep.mubr.f32.mxu0 0.0
        %864 = vmatmul.mubr.f32.gmra.mrb[0].mxu0 %v779
        %v865 = vpop.f32.mrb[0].mxu0
        %v866 = vadd.f32 0.0, %v865
        %v867 = vpop.f32.mrb[0].mxu0
        %v868 = vadd.f32 0.0, %v867
        %869 = vmatprep.mubr.f32.mxu0 0.0
        %870 = vmatmul.mubr.f32.gmra.mrb[0].mxu0 %v782
        %v871 = vpop.f32.mrb[0].mxu0
        %v872 = vadd.f32 0.0, %v871
        %v873 = vpop.f32.mrb[0].mxu0
        %v874 = vadd.f32 0.0, %v873
        %875 = vmatprep.mubr.f32.mxu0 0.0
        %876 = vmatmul.mubr.f32.gmra.mrb[0].mxu0 %v785
        %v877 = vpop.f32.mrb[0].mxu0
        %v878 = vadd.f32 0.0, %v877
        %v879 = vpop.f32.mrb[0].mxu0
        %v880 = vadd.f32 0.0, %v879
        %881 = vmatprep.mubr.f32.mxu0 0.0
        %882 = vmatmul.mubr.f32.gmra.mrb[0].mxu0 %v788
        %v883 = vpop.f32.mrb[0].mxu0
        %v884 = vadd.f32 0.0, %v883
        %v885 = vpop.f32.mrb[0].mxu0
        %v886 = vadd.f32 0.0, %v885
        %887 = vmatprep.mubr.f32.mxu0 0.0
        %888 = vmatmul.mubr.f32.gmra.mrb[0].mxu0 %v791
        %v889 = vpop.f32.mrb[0].mxu0
        %v890 = vadd.f32 0.0, %v889
        %v891 = vpop.f32.mrb[0].mxu0
        %v892 = vadd.f32 0.0, %v891
        %893 = vdwg.mxu0
        %v894 = vadd.f32 %v730, %v860
        %v895 = vadd.f32 %v732, %v862
        %v896 = vadd.f32 %v736, %v866
        %v897 = vadd.f32 %v738, %v868
        %v898 = vadd.f32 %v742, %v872
        %v899 = vadd.f32 %v744, %v874
        %v900 = vadd.f32 %v748, %v878
        %v901 = vadd.f32 %v750, %v880
        %v902 = vadd.f32 %v754, %v884
        %v903 = vadd.f32 %v756, %v886
        %v904 = vadd.f32 %v760, %v890
        %v905 = vadd.f32 %v762, %v892
        %v906 = vld [vmem:[%s442] sm:$0xff]
        %v907 = vld [vmem:[%s442 + $0x8] sm:$0xff]
        %v908 = vld [vmem:[%s442 + $0x10] sm:$0xff]
        %v909 = vld [vmem:[%s442 + $0x18] sm:$0xff]
        %v910 = vld [vmem:[%s442 + $0x20] sm:$0xff]
        %v911 = vld [vmem:[%s442 + $0x28] sm:$0xff]
        %v912 = vld [vmem:[%s7] sm:$0xff]
        %v914 = vcombine.high %v912, %v912
        %vm915 = vcmask 31744
        %v917 = vsel %vm915, %v906, 0
        %v920 = vsel %vm915, %v907, 0
        %v923 = vsel %vm915, %v908, 0
        %v926 = vsel %vm915, %v909, 0
        %v929 = vsel %vm915, %v910, 0
        %v932 = vsel %vm915, %v911, 0
        %vm934 = vcmask 1043456
        %v935 = vsel %vm934, %v912, 0
        %v937 = vsel %vm934, %v914, 0
        %939 = vmatprep.subr.mxu0 %v937
        %940 = vmatpush1.msra.mxu0 %v935
        %941 = vmatprep.subr.mxu0 0.0
        %942 = vmatpush1.msra.mxu0 0.0
        %943 = vmatprep.subr.mxu0 0.0
        %944 = vmatpush1.msra.mxu0 0.0
        %945 = vmatprep.subr.mxu0 0.0
        %946 = vmatpush1.msra.mxu0 0.0
        %947 = vmatprep.subr.mxu0 0.0
        %948 = vmatpush1.msra.mxu0 0.0
        %949 = vmatprep.subr.mxu0 0.0
        %950 = vmatpush1.msra.mxu0 0.0
        %951 = vmatprep.subr.mxu0 0.0
        %952 = vmatpush1.msra.mxu0 0.0
        %953 = vmatprep.subr.mxu0 0.0
        %954 = vmatpush1.msra.mxu0 0.0
        %955 = vmatprep.subr.mxu0 0.0
        %956 = vmatpush1.msra.mxu0 0.0
        %957 = vmatprep.subr.mxu0 0.0
        %958 = vmatpush1.msra.mxu0 0.0
        %959 = vmatprep.subr.mxu0 0.0
        %960 = vmatpush1.msra.mxu0 0.0
        %961 = vmatprep.subr.mxu0 0.0
        %962 = vmatpush1.msra.mxu0 0.0
        %963 = vmatprep.subr.mxu0 0.0
        %964 = vmatpush1.msra.mxu0 0.0
        %965 = vmatprep.subr.mxu0 0.0
        %966 = vmatpush1.msra.mxu0 0.0
        %967 = vmatprep.subr.mxu0 0.0
        %968 = vmatpush1.msra.mxu0 0.0
        %969 = vmatprep.subr.mxu0 0.0
        %970 = vmatpush1.msra.mxu0 0.0
        %971 = vmatprep.subr.mxu0 0.0
        %972 = vmatpush1.msra.mxu0 0.0
        %973 = vmatprep.subr.mxu0 0.0
        %974 = vmatpush1.msra.mxu0 0.0
        %975 = vmatprep.subr.mxu0 0.0
        %976 = vmatpush1.msra.mxu0 0.0
        %977 = vmatprep.subr.mxu0 0.0
        %978 = vmatpush1.msra.mxu0 0.0
        %979 = vmatprep.subr.mxu0 0.0
        %980 = vmatpush1.msra.mxu0 0.0
        %981 = vmatprep.subr.mxu0 0.0
        %982 = vmatpush1.msra.mxu0 0.0
        %983 = vmatprep.subr.mxu0 0.0
        %984 = vmatpush1.msra.mxu0 0.0
        %985 = vmatprep.subr.mxu0 0.0
        %986 = vmatpush1.msra.mxu0 0.0
        %987 = vmatprep.subr.mxu0 0.0
        %988 = vmatpush1.msra.mxu0 0.0
        %989 = vmatprep.subr.mxu0 0.0
        %990 = vmatpush1.msra.mxu0 0.0
        %991 = vmatprep.subr.mxu0 0.0
        %992 = vmatpush1.msra.mxu0 0.0
        %993 = vmatprep.subr.mxu0 0.0
        %994 = vmatpush1.msra.mxu0 0.0
        %995 = vmatprep.subr.mxu0 0.0
        %996 = vmatpush1.msra.mxu0 0.0
        %997 = vmatprep.subr.mxu0 0.0
        %998 = vmatpush1.msra.mxu0 0.0
        %999 = vmatprep.subr.mxu0 0.0
        %1000 = vmatpush1.msra.mxu0 0.0
        %1001 = vmatprep.subr.mxu0 0.0
        %1002 = vmatpush1.msra.mxu0 0.0
        %1003 = vmatprep.mubr.f32.mxu0 0.0
        %1004 = vmatmul.mubr.f32.gmra.mrb[0].mxu0 %v917
        %v1005 = vpop.f32.mrb[0].mxu0
        %v1006 = vadd.f32 0.0, %v1005
        %v1007 = vpop.f32.mrb[0].mxu0
        %v1008 = vadd.f32 0.0, %v1007
        %1009 = vmatprep.mubr.f32.mxu0 0.0
        %1010 = vmatmul.mubr.f32.gmra.mrb[0].mxu0 %v920
        %v1011 = vpop.f32.mrb[0].mxu0
        %v1012 = vadd.f32 0.0, %v1011
        %v1013 = vpop.f32.mrb[0].mxu0
        %v1014 = vadd.f32 0.0, %v1013
        %1015 = vmatprep.mubr.f32.mxu0 0.0
        %1016 = vmatmul.mubr.f32.gmra.mrb[0].mxu0 %v923
        %v1017 = vpop.f32.mrb[0].mxu0
        %v1018 = vadd.f32 0.0, %v1017
        %v1019 = vpop.f32.mrb[0].mxu0
        %v1020 = vadd.f32 0.0, %v1019
        %1021 = vmatprep.mubr.f32.mxu0 0.0
        %1022 = vmatmul.mubr.f32.gmra.mrb[0].mxu0 %v926
        %v1023 = vpop.f32.mrb[0].mxu0
        %v1024 = vadd.f32 0.0, %v1023
        %v1025 = vpop.f32.mrb[0].mxu0
        %v1026 = vadd.f32 0.0, %v1025
        %1027 = vmatprep.mubr.f32.mxu0 0.0
        %1028 = vmatmul.mubr.f32.gmra.mrb[0].mxu0 %v929
        %v1029 = vpop.f32.mrb[0].mxu0
        %v1030 = vadd.f32 0.0, %v1029
        %v1031 = vpop.f32.mrb[0].mxu0
        %v1032 = vadd.f32 0.0, %v1031
        %1033 = vmatprep.mubr.f32.mxu0 0.0
        %1034 = vmatmul.mubr.f32.gmra.mrb[0].mxu0 %v932
        %v1035 = vpop.f32.mrb[0].mxu0
        %v1036 = vadd.f32 0.0, %v1035
        %v1037 = vpop.f32.mrb[0].mxu0
        %v1038 = vadd.f32 0.0, %v1037
        %1039 = vdwg.mxu0
        %v1040 = vadd.f32 %v894, %v1006
        %v1041 = vadd.f32 %v895, %v1008
        %v1042 = vadd.f32 %v896, %v1012
        %v1043 = vadd.f32 %v897, %v1014
        %v1044 = vadd.f32 %v898, %v1018
        %v1045 = vadd.f32 %v899, %v1020
        %v1046 = vadd.f32 %v900, %v1024
        %v1047 = vadd.f32 %v901, %v1026
        %v1048 = vadd.f32 %v902, %v1030
        %v1049 = vadd.f32 %v903, %v1032
        %v1050 = vadd.f32 %v904, %v1036
        %v1051 = vadd.f32 %v905, %v1038
        %v1052 = vadd.f32 %v1040, %v1044
        %v1053 = vadd.f32 %v1041, %v1045
        %v1054 = vadd.f32 %v1042, %v1046
        %v1055 = vadd.f32 %v1043, %v1047
        %v1056 = vadd.f32 %v1052, %v1048
        %v1057 = vadd.f32 %v1053, %v1049
        %v1058 = vadd.f32 %v1054, %v1050
        %v1059 = vadd.f32 %v1055, %v1051
        %v1060 = vadd.f32 %v1056, %v1057
        %1061 = vadd.xlane.f32.xlu0 %v1060
        %v1062 = vpop.xlane.xlu0 %1061
        %v1063 = vadd.f32 %v1058, %v1059
        %1064 = vadd.xlane.f32.xlu0 %v1063
        %v1065 = vpop.xlane.xlu0 %1064
        %v1066 = vmul.f32 %v1062, 0.00390625
        %v1067 = vmul.f32 %v1065, 0.00390625
        %v1068 = vld [vmem:[%s8] sm:$0x3]
        %v1070 = vsel %vm774, %v1068, 0
        %1072 = vmatprep.subr.mxu0 0.0
        %1073 = vmatpush1.msra.mxu0 %v1066
        %1074 = vmatprep.subr.mxu0 0.0
        %1075 = vmatpush1.msra.mxu0 %v1067
        %1076 = vmatprep.subr.mxu0 0.0
        %1077 = vmatpush1.msra.mxu0 0.0
        %1078 = vmatprep.subr.mxu0 0.0
        %1079 = vmatpush1.msra.mxu0 0.0
        %1080 = vmatprep.subr.mxu0 0.0
        %1081 = vmatpush1.msra.mxu0 0.0
        %1082 = vmatprep.subr.mxu0 0.0
        %1083 = vmatpush1.msra.mxu0 0.0
        %1084 = vmatprep.subr.mxu0 0.0
        %1085 = vmatpush1.msra.mxu0 0.0
        %1086 = vmatprep.subr.mxu0 0.0
        %1087 = vmatpush1.msra.mxu0 0.0
        %1088 = vmatprep.subr.mxu0 0.0
        %1089 = vmatpush1.msra.mxu0 0.0
        %1090 = vmatprep.subr.mxu0 0.0
        %1091 = vmatpush1.msra.mxu0 0.0
        %1092 = vmatprep.subr.mxu0 0.0
        %1093 = vmatpush1.msra.mxu0 0.0
        %1094 = vmatprep.subr.mxu0 0.0
        %1095 = vmatpush1.msra.mxu0 0.0
        %1096 = vmatprep.subr.mxu0 0.0
        %1097 = vmatpush1.msra.mxu0 0.0
        %1098 = vmatprep.subr.mxu0 0.0
        %1099 = vmatpush1.msra.mxu0 0.0
        %1100 = vmatprep.subr.mxu0 0.0
        %1101 = vmatpush1.msra.mxu0 0.0
        %1102 = vmatprep.subr.mxu0 0.0
        %1103 = vmatpush1.msra.mxu0 0.0
        %1104 = vmatprep.subr.mxu0 0.0
        %1105 = vmatpush1.msra.mxu0 0.0
        %1106 = vmatprep.subr.mxu0 0.0
        %1107 = vmatpush1.msra.mxu0 0.0
        %1108 = vmatprep.subr.mxu0 0.0
        %1109 = vmatpush1.msra.mxu0 0.0
        %1110 = vmatprep.subr.mxu0 0.0
        %1111 = vmatpush1.msra.mxu0 0.0
        %1112 = vmatprep.subr.mxu0 0.0
        %1113 = vmatpush1.msra.mxu0 0.0
        %1114 = vmatprep.subr.mxu0 0.0
        %1115 = vmatpush1.msra.mxu0 0.0
        %1116 = vmatprep.subr.mxu0 0.0
        %1117 = vmatpush1.msra.mxu0 0.0
        %1118 = vmatprep.subr.mxu0 0.0
        %1119 = vmatpush1.msra.mxu0 0.0
        %1120 = vmatprep.subr.mxu0 0.0
        %1121 = vmatpush1.msra.mxu0 0.0
        %1122 = vmatprep.subr.mxu0 0.0
        %1123 = vmatpush1.msra.mxu0 0.0
        %1124 = vmatprep.subr.mxu0 0.0
        %1125 = vmatpush1.msra.mxu0 0.0
        %1126 = vmatprep.subr.mxu0 0.0
        %1127 = vmatpush1.msra.mxu0 0.0
        %1128 = vmatprep.subr.mxu0 0.0
        %1129 = vmatpush1.msra.mxu0 0.0
        %1130 = vmatprep.subr.mxu0 0.0
        %1131 = vmatpush1.msra.mxu0 0.0
        %1132 = vmatprep.subr.mxu0 0.0
        %1133 = vmatpush1.msra.mxu0 0.0
        %1134 = vmatprep.subr.mxu0 0.0
        %1135 = vmatpush1.msra.mxu0 0.0
        %1136 = vmatprep.mubr.f32.mxu0 0.0
        %1137 = vmatmul.mubr.f32.gmra.mrb[0].mxu0 %v1070
        %v1138 = vpop.f32.mrb[0].mxu0
        %v1139 = vadd.f32 0.0, %v1138
        %v1140 = vpop.f32.mrb[0].mxu0
        %1141 = vdwg.mxu0
        %v1142 = vmax.f32 %v1139, 0.0
        %v1143 = vld [vmem:[%s9] sm:$0xff]
        %v1144 = vld [vmem:[%s9 + $0x8] sm:$0xff]
        %v1145 = vld [vmem:[%s9 + $0x10] sm:$0xff]
        %v1146 = vld [vmem:[%s9 + $0x18] sm:$0xff]
        %v1147 = vld [vmem:[%s9 + $0x20] sm:$0xff]
        %v1148 = vld [vmem:[%s9 + $0x28] sm:$0xff]
        %vm1149 = vcmask 15360
        %v1151 = vsel %vm1149, %v1143, 0
        %v1154 = vsel %vm1149, %v1144, 0
        %v1157 = vsel %vm1149, %v1145, 0
        %v1160 = vsel %vm1149, %v1146, 0
        %v1163 = vsel %vm1149, %v1147, 0
        %v1166 = vsel %vm1149, %v1148, 0
        %vm1168 = vcmask 1041408
        %v1170 = vsel %vm1168, %v1142, 0
        %1172 = vmatprep.subr.mxu0 0.0
        %1173 = vmatpush1.msra.mxu0 %v1170
        %1174 = vmatprep.subr.mxu0 0.0
        %1175 = vmatpush1.msra.mxu0 0.0
        %1176 = vmatprep.subr.mxu0 0.0
        %1177 = vmatpush1.msra.mxu0 0.0
        %1178 = vmatprep.subr.mxu0 0.0
        %1179 = vmatpush1.msra.mxu0 0.0
        %1180 = vmatprep.subr.mxu0 0.0
        %1181 = vmatpush1.msra.mxu0 0.0
        %1182 = vmatprep.subr.mxu0 0.0
        %1183 = vmatpush1.msra.mxu0 0.0
        %1184 = vmatprep.subr.mxu0 0.0
        %1185 = vmatpush1.msra.mxu0 0.0
        %1186 = vmatprep.subr.mxu0 0.0
        %1187 = vmatpush1.msra.mxu0 0.0
        %1188 = vmatprep.subr.mxu0 0.0
        %1189 = vmatpush1.msra.mxu0 0.0
        %1190 = vmatprep.subr.mxu0 0.0
        %1191 = vmatpush1.msra.mxu0 0.0
        %1192 = vmatprep.subr.mxu0 0.0
        %1193 = vmatpush1.msra.mxu0 0.0
        %1194 = vmatprep.subr.mxu0 0.0
        %1195 = vmatpush1.msra.mxu0 0.0
        %1196 = vmatprep.subr.mxu0 0.0
        %1197 = vmatpush1.msra.mxu0 0.0
        %1198 = vmatprep.subr.mxu0 0.0
        %1199 = vmatpush1.msra.mxu0 0.0
        %1200 = vmatprep.subr.mxu0 0.0
        %1201 = vmatpush1.msra.mxu0 0.0
        %1202 = vmatprep.subr.mxu0 0.0
        %1203 = vmatpush1.msra.mxu0 0.0
        %1204 = vmatprep.subr.mxu0 0.0
        %1205 = vmatpush1.msra.mxu0 0.0
        %1206 = vmatprep.subr.mxu0 0.0
        %1207 = vmatpush1.msra.mxu0 0.0
        %1208 = vmatprep.subr.mxu0 0.0
        %1209 = vmatpush1.msra.mxu0 0.0
        %1210 = vmatprep.subr.mxu0 0.0
        %1211 = vmatpush1.msra.mxu0 0.0
        %1212 = vmatprep.subr.mxu0 0.0
        %1213 = vmatpush1.msra.mxu0 0.0
        %1214 = vmatprep.subr.mxu0 0.0
        %1215 = vmatpush1.msra.mxu0 0.0
        %1216 = vmatprep.subr.mxu0 0.0
        %1217 = vmatpush1.msra.mxu0 0.0
        %1218 = vmatprep.subr.mxu0 0.0
        %1219 = vmatpush1.msra.mxu0 0.0
        %1220 = vmatprep.subr.mxu0 0.0
        %1221 = vmatpush1.msra.mxu0 0.0
        %1222 = vmatprep.subr.mxu0 0.0
        %1223 = vmatpush1.msra.mxu0 0.0
        %1224 = vmatprep.subr.mxu0 0.0
        %1225 = vmatpush1.msra.mxu0 0.0
        %1226 = vmatprep.subr.mxu0 0.0
        %1227 = vmatpush1.msra.mxu0 0.0
        %1228 = vmatprep.subr.mxu0 0.0
        %1229 = vmatpush1.msra.mxu0 0.0
        %1230 = vmatprep.subr.mxu0 0.0
        %1231 = vmatpush1.msra.mxu0 0.0
        %1232 = vmatprep.subr.mxu0 0.0
        %1233 = vmatpush1.msra.mxu0 0.0
        %1234 = vmatprep.subr.mxu0 0.0
        %1235 = vmatpush1.msra.mxu0 0.0
        %1236 = vmatprep.mubr.f32.mxu0 0.0
        %1237 = vmatmul.mubr.f32.gmra.mrb[0].mxu0 %v1151
        %v1238 = vpop.f32.mrb[0].mxu0
        %v1239 = vadd.f32 0.0, %v1238
        %v1240 = vpop.f32.mrb[0].mxu0
        %1241 = vmatprep.mubr.f32.mxu0 0.0
        %1242 = vmatmul.mubr.f32.gmra.mrb[0].mxu0 %v1154
        %v1243 = vpop.f32.mrb[0].mxu0
        %v1244 = vadd.f32 0.0, %v1243
        %v1245 = vpop.f32.mrb[0].mxu0
        %1246 = vmatprep.mubr.f32.mxu0 0.0
        %1247 = vmatmul.mubr.f32.gmra.mrb[0].mxu0 %v1157
        %v1248 = vpop.f32.mrb[0].mxu0
        %v1249 = vadd.f32 0.0, %v1248
        %v1250 = vpop.f32.mrb[0].mxu0
        %1251 = vmatprep.mubr.f32.mxu0 0.0
        %1252 = vmatmul.mubr.f32.gmra.mrb[0].mxu0 %v1160
        %v1253 = vpop.f32.mrb[0].mxu0
        %v1254 = vadd.f32 0.0, %v1253
        %v1255 = vpop.f32.mrb[0].mxu0
        %1256 = vmatprep.mubr.f32.mxu0 0.0
        %1257 = vmatmul.mubr.f32.gmra.mrb[0].mxu0 %v1163
        %v1258 = vpop.f32.mrb[0].mxu0
        %v1259 = vadd.f32 0.0, %v1258
        %v1260 = vpop.f32.mrb[0].mxu0
        %1261 = vmatprep.mubr.f32.mxu0 0.0
        %1262 = vmatmul.mubr.f32.gmra.mrb[0].mxu0 %v1166
        %v1263 = vpop.f32.mrb[0].mxu0
        %v1264 = vadd.f32 0.0, %v1263
        %v1265 = vpop.f32.mrb[0].mxu0
        %1266 = vdwg.mxu0
        %v1267 = vxor.u32 %v1239, 2147483648
        %v1268 = vxor.u32 %v1244, 2147483648
        %v1269 = vxor.u32 %v1249, 2147483648
        %v1270 = vxor.u32 %v1254, 2147483648
        %v1271 = vxor.u32 %v1259, 2147483648
        %v1272 = vxor.u32 %v1264, 2147483648
        %v1273 = vmul.f32 %v1267, 1.442695
        %v1274 = vpow.pop %v1273
        %v1275 = vmul.f32 %v1268, 1.442695
        %v1276 = vpow.pop %v1275
        %v1277 = vmul.f32 %v1269, 1.442695
        %v1278 = vpow.pop %v1277
        %v1279 = vmul.f32 %v1270, 1.442695
        %v1280 = vpow.pop %v1279
        %v1281 = vmul.f32 %v1271, 1.442695
        %v1282 = vpow.pop %v1281
        %v1283 = vmul.f32 %v1272, 1.442695
        %v1284 = vpow.pop %v1283
        %v1285 = vadd.f32 %v1274, 1.0
        %v1286 = vadd.f32 %v1276, 1.0
        %v1287 = vadd.f32 %v1278, 1.0
        %v1288 = vadd.f32 %v1280, 1.0
        %v1289 = vadd.f32 %v1282, 1.0
        %v1290 = vadd.f32 %v1284, 1.0
        %v1291 = vrcp.pop %v1285
        %v1292 = vmul.f32 1.0, %v1291
        %v1293 = vrcp.pop %v1286
        %v1294 = vmul.f32 1.0, %v1293
        %v1295 = vrcp.pop %v1287
        %v1296 = vmul.f32 1.0, %v1295
        %v1297 = vrcp.pop %v1288
        %v1298 = vmul.f32 1.0, %v1297
        %v1299 = vrcp.pop %v1289
        %v1300 = vmul.f32 1.0, %v1299
        %v1301 = vrcp.pop %v1290
        %v1302 = vmul.f32 1.0, %v1301
        %1304 = vset.pattern.permute.xlu0 0
        %1305 = vperm.xlu0 %1304, %v1292
        %v1306 = vpop.permute.xlu0 %1305
        %1309 = vset.pattern.permute.xlu0 0
        %1310 = vperm.xlu0 %1309, %v1294
        %v1311 = vpop.permute.xlu0 %1310
        %v1313 = vmul.f32 %v1040, %v1306
        %v1314 = vmul.f32 %v1041, %v1306
        %v1315 = vmul.f32 %v1042, %v1311
        %v1316 = vmul.f32 %v1043, %v1311
        %1318 = vset.pattern.permute.xlu0 0
        %1319 = vperm.xlu0 %1318, %v1296
        %v1320 = vpop.permute.xlu0 %1319
        %1323 = vset.pattern.permute.xlu0 0
        %1324 = vperm.xlu0 %1323, %v1298
        %v1325 = vpop.permute.xlu0 %1324
        %v1327 = vmul.f32 %v1044, %v1320
        %v1328 = vmul.f32 %v1045, %v1320
        %v1329 = vmul.f32 %v1046, %v1325
        %v1330 = vmul.f32 %v1047, %v1325
        %v1331 = vadd.f32 %v1313, %v1327
        %v1332 = vadd.f32 %v1314, %v1328
        %v1333 = vadd.f32 %v1315, %v1329
        %v1334 = vadd.f32 %v1316, %v1330
        %1336 = vset.pattern.permute.xlu0 0
        %1337 = vperm.xlu0 %1336, %v1300
        %v1338 = vpop.permute.xlu0 %1337
        %1341 = vset.pattern.permute.xlu0 0
        %1342 = vperm.xlu0 %1341, %v1302
        %v1343 = vpop.permute.xlu0 %1342
        %v1345 = vmul.f32 %v1048, %v1338
        %v1346 = vmul.f32 %v1049, %v1338
        %v1347 = vmul.f32 %v1050, %v1343
        %v1348 = vmul.f32 %v1051, %v1343
        %v1349 = vadd.f32 %v1331, %v1345
        %v1350 = vadd.f32 %v1332, %v1346
        %v1351 = vadd.f32 %v1333, %v1347
        %v1352 = vadd.f32 %v1334, %v1348
        %1353 = vst [vmem:[%s418] sm:$0xff] %v1349
        %1354 = vst [vmem:[%s418 + $0x8] sm:$0xff] %v1350
        %1355 = vst [vmem:[%s418 + $0x10] sm:$0xff] %v1351
        %1356 = vst [vmem:[%s418 + $0x18] sm:$0xff] %v1352
        %s1357 = sand.u32 %s263, 1
        %s1358 = scalar_lea.sflag [#allocation4], %s1357
        %s1359 = sand.u32 %s263, 1
        %s1360 = smul.addr %s1359, 32
        %s1361 = scalar_lea.vmem [#allocation5], %s1360
        // Predicated region
        $region65: #{tpu_custom_call.1} parent=59 // pred_check
          %p1362 = pneg %p273
        $region66: #{tpu_custom_call.1} parent=59 // pred_check_branch
          %1364 = sbr.rel (%p1362) target = $region68
        $region67: #{tpu_custom_call.1} parent=59 // pred_region
          %s1365 = smul.u32 2, %s25
          %s1367 = ssub.s32 512, 512
          %1368 = vsyncadd %s1358, %s1367
          %s1369 = smul.addr %s1365, 2
          %s1370 = smul.addr %s1369, 128
          %s1371 = scalar_lea.hbm %s10, %s1370
          %s1372 = sshll.u32 %s1361, 4
          %s1373 = int_to_ptr.vmem [resolvable:$true] %s1372
          %1378 = dma.vmem_to_hbm [thread:$0]  %s1373, 512, %s1371, %s1358, 256, 256, 16
        $region68: #{tpu_custom_call.1} parent=59 // pred_fallthru
          _
      $region60: #{tpu_custom_call.1} parent=5 // pred_fallthru
        _
      %p1379 = scmp.le.s32.totalorder 2, %s20
      // Predicated region
      $region69: #{tpu_custom_call.1} parent=5 // pred_check
        %p1380 = pneg %p1379
      $region70: #{tpu_custom_call.1} parent=5 // pred_check_branch
        %1382 = sbr.rel (%p1380) target = $region72
      $region71: #{tpu_custom_call.1} parent=5 // pred_region
        %s1383 = ssub.s32 %s20, 2
        // Predicated region
        $region73: #{tpu_custom_call.1} parent=71 // pred_check
          %p1384 = pneg %p279
        $region74: #{tpu_custom_call.1} parent=71 // pred_check_branch
          %1386 = sbr.rel (%p1384) target = $region76
        $region75: #{tpu_custom_call.1} parent=71 // pred_region
          %s1387 = sand.u32 %s264, 1
          %s1388 = scalar_lea.sflag [#allocation4], %s1387
          %s1389 = sand.u32 %s264, 1
          %s1390 = smul.addr %s1389, 32
          %s1391 = scalar_lea.vmem [#allocation5], %s1390
          %1392 = dma.done %s1388, 512
        $region76: #{tpu_custom_call.1} parent=71 // pred_fallthru
          _
      $region72: #{tpu_custom_call.1} parent=5 // pred_fallthru
        _
    $region6: #{tpu_custom_call.1} parent=1 // loop_footer
      %s24 = sadd.s32 1, %s20
    $region7: #{tpu_custom_call.1} parent=1 // loop_footer_branch
      %19 = sbr.rel target = $region3
    $region8: #{tpu_custom_call.1} parent=1 // loop_exit
      _
    %1393 = vsyncpa [#allocation3], 1
    %s1394 = scalar_lea.sflag [#allocation3], 1
    %1395 = vsyncpa %s1394, 1
    %1396 = vsyncpa [#allocation4], 1
    %s1397 = scalar_lea.sflag [#allocation4], 1
    %1398 = vsyncpa %s1397, 1

</llo_original>
